<compile_context>
chip_gen: v7x
topology: tpu7x:2x2x1
jax: 0.10.0
libtpu: 0.0.40
codegen_flags: <defaults>
</compile_context>

<pallas_src>
import jax
import jax.numpy as jnp
from jax.experimental import pallas as pl
from jax.experimental.pallas import tpu as pltpu


# Problem sizes (flattened NCHW image -> encoder stub -> projection head).
D_FLAT = 3 * 16 * 16    # 768, multiple of 128 (lane-friendly)
D_FEAT = 512            # CLIP feature dim
D_HID = 256
D_OUT = 128


def _round_up(x, m):
    return ((x + m - 1) // m) * m


# ----------------------------------------------------------------------------
# Fused Pallas kernel:
#   feats = x_flat @ W_enc                (frozen encoder stub, bf16 -> f32 acc)
#   h     = relu(feats @ W1 + b1)         (projection head layer 1)
#   out   = h @ W2 + b2                   (projection head layer 2)
# All weights stored transposed vs. PyTorch, i.e. (in, out), so y = x @ W.
# ----------------------------------------------------------------------------
def fused_clip_head_kernel(x_ref, wenc_ref, w1_ref, b1_ref, w2_ref, b2_ref, o_ref):
    x = x_ref[...]                                                    # (TB, 768) bf16
    # Frozen encoder stub on the MXU (bf16 operands, f32 accumulation).
    feats = jnp.dot(x, wenc_ref[...], preferred_element_type=jnp.float32)
    # torch does features.float(); accumulation is already f32, feed the MXU bf16.
    h = jnp.dot(feats.astype(jnp.bfloat16), w1_ref[...],
                preferred_element_type=jnp.float32)
    h = jnp.maximum(h + b1_ref[...], 0.0)                             # bias + ReLU on VPU
    y = jnp.dot(h.astype(jnp.bfloat16), w2_ref[...],
                preferred_element_type=jnp.float32)
    o_ref[...] = y + b2_ref[...]                                      # (TB, 128) f32


def fused_forward(x_flat, w_enc, w1, b1, w2, b2):
    """x_flat: (B, 768) bf16  ->  (B, 128) f32."""
    B = x_flat.shape[0]
    # Batch tile: big when the batch allows (MXU row fill + DMA pipelining),
    # padded to a sublane-friendly multiple of 16 for small batches.
    TB = 256 if B >= 256 else _round_up(max(B, 1), 16)
    B_pad = _round_up(B, TB)
    if B_pad != B:
        x_flat = jnp.pad(x_flat, ((0, B_pad - B), (0, 0)))
    grid = (B_pad // TB,)

    flops = 2 * B_pad * (D_FLAT * D_FEAT + D_FEAT * D_HID + D_HID * D_OUT)
    bytes_accessed = (B_pad * D_FLAT * 2          # x (bf16)
                      + D_FLAT * D_FEAT * 2       # w_enc (bf16)
                      + D_FEAT * D_HID * 2        # w1 (bf16)
                      + D_HID * 4                 # b1 (f32)
                      + D_HID * D_OUT * 2         # w2 (bf16)
                      + D_OUT * 4                 # b2 (f32)
                      + B_pad * D_OUT * 4)        # out (f32)

    out = pl.pallas_call(
        fused_clip_head_kernel,
        out_shape=jax.ShapeDtypeStruct((B_pad, D_OUT), jnp.float32),
        grid=grid,
        in_specs=[
            pl.BlockSpec((TB, D_FLAT), lambda i: (i, 0)),       # batch-tiled input
            pl.BlockSpec((D_FLAT, D_FEAT), lambda i: (0, 0)),   # weights: constant
            pl.BlockSpec((D_FEAT, D_HID), lambda i: (0, 0)),    #   block -> resident,
            pl.BlockSpec((1, D_HID), lambda i: (0, 0)),         #   not re-DMA'd
            pl.BlockSpec((D_HID, D_OUT), lambda i: (0, 0)),
            pl.BlockSpec((1, D_OUT), lambda i: (0, 0)),
        ],
        out_specs=pl.BlockSpec((TB, D_OUT), lambda i: (i, 0)),
        compiler_params=pltpu.CompilerParams(
            dimension_semantics=("parallel",)),                 # v7x: shard batch over 2 TCs
        cost_estimate=pl.CostEstimate(
            flops=flops, transcendentals=0, bytes_accessed=bytes_accessed),
    )(x_flat, w_enc, w1, b1, w2, b2)
    return out[:B]


# ----------------------------------------------------------------------------
# Deterministic parameter construction (synthetic, no checkpoint loading).
# PyTorch nn.Linear(512,256) weight is (256,512); we keep the transposed
# (512,256) layout for direct x @ W on the MXU.  Matmul weights are bf16,
# biases stay f32 (added post-accumulation on the VPU).
# ----------------------------------------------------------------------------
def init_params(key):
    k1, k2, k3, k4, k5 = jax.random.split(key, 5)
    w1 = (jax.random.uniform(k1, (D_FEAT, D_HID), jnp.float32, -1.0, 1.0)
          / jnp.sqrt(float(D_FEAT))).astype(jnp.bfloat16)
    b1 = (jax.random.uniform(k2, (1, D_HID), jnp.float32, -1.0, 1.0)
          / jnp.sqrt(float(D_FEAT)))
    w2 = (jax.random.uniform(k3, (D_HID, D_OUT), jnp.float32, -1.0, 1.0)
          / jnp.sqrt(float(D_HID))).astype(jnp.bfloat16)
    b2 = (jax.random.uniform(k4, (1, D_OUT), jnp.float32, -1.0, 1.0)
          / jnp.sqrt(float(D_HID)))
    # Synthetic "CLIP image encoder" stub weight: flattened NCHW image -> 512.
    w_enc = (jax.random.normal(k5, (D_FLAT, D_FEAT), jnp.float32)
             * 0.02).astype(jnp.bfloat16)
    return w_enc, w1, b1, w2, b2


def custom_clip_classifier_forward(images_nchw, params):
    """images_nchw: (B, 3, H, W) -> (B, 128)."""
    w_enc, w1, b1, w2, b2 = params
    B = images_nchw.shape[0]
    x_flat = images_nchw.reshape(B, -1).astype(jnp.bfloat16)   # flatten + bf16 MXU feed
    return fused_forward(x_flat, w_enc, w1, b1, w2, b2)


if __name__ == "__main__":
    key = jax.random.PRNGKey(0)
    k_img, k_par = jax.random.split(key)

    # Small NCHW image batch consistent with the module's forward signature.
    images = jax.random.normal(k_img, (8, 3, 16, 16), jnp.float32)
    params = init_params(k_par)

    out = custom_clip_classifier_forward(images, params)
    out = jax.block_until_ready(out)

    # Reference check against plain JAX with the same bf16 operand casts.
    w_enc, w1, b1, w2, b2 = params
    x_flat = images.reshape(images.shape[0], -1).astype(jnp.bfloat16)
    feats = x_flat.astype(jnp.float32) @ w_enc.astype(jnp.float32)
    h = jnp.maximum(
        feats.astype(jnp.bfloat16).astype(jnp.float32) @ w1.astype(jnp.float32) + b1,
        0.0)
    ref = h.astype(jnp.bfloat16).astype(jnp.float32) @ w2.astype(jnp.float32) + b2

    assert out.shape == (8, 128), out.shape
    assert jnp.allclose(out, ref, atol=5e-2, rtol=5e-2), float(
        jnp.max(jnp.abs(out - ref)))

    print("KERNEL_OK")
</pallas_src>

<mosaic_0001>
module attributes {stable_mosaic.version = 11 : i64} {
  func.func @fused_clip_head_kernel(%arg0: i32, %arg1: memref<16x768xbf16, #tpu.memory_space<vmem>>, %arg2: memref<768x512xbf16, #tpu.memory_space<vmem>>, %arg3: memref<512x256xbf16, #tpu.memory_space<vmem>>, %arg4: memref<1x256xf32, #tpu.memory_space<vmem>>, %arg5: memref<256x128xbf16, #tpu.memory_space<vmem>>, %arg6: memref<1x128xf32, #tpu.memory_space<vmem>>, %arg7: memref<16x128xf32, #tpu.memory_space<vmem>>) attributes {dimension_semantics = [#tpu.dimension_semantics<parallel>], iteration_bounds = array<i64: 1>, scalar_prefetch = 0 : i64, scratch_operands = 0 : i64, tpu.core_type = #tpu.core_type<tc>, window_params = [{transform_indices = @transform_0, window_bounds = array<i64: 16, 768>}, {pipeline_mode = #tpu.pipeline_mode<synchronous>, transform_indices = @transform_1, window_bounds = array<i64: 768, 512>}, {pipeline_mode = #tpu.pipeline_mode<synchronous>, transform_indices = @transform_2, window_bounds = array<i64: 512, 256>}, {pipeline_mode = #tpu.pipeline_mode<synchronous>, transform_indices = @transform_3, window_bounds = array<i64: 1, 256>}, {pipeline_mode = #tpu.pipeline_mode<synchronous>, transform_indices = @transform_4, window_bounds = array<i64: 256, 128>}, {pipeline_mode = #tpu.pipeline_mode<synchronous>, transform_indices = @transform_5, window_bounds = array<i64: 1, 128>}, {transform_indices = @transform_6, window_bounds = array<i64: 16, 128>}]} {
    %c0 = arith.constant 0 : index
    %c0_0 = arith.constant 0 : index
    %0 = vector.load %arg1[%c0, %c0_0] : memref<16x768xbf16, #tpu.memory_space<vmem>>, vector<16x768xbf16>
    %c0_1 = arith.constant 0 : index
    %c0_2 = arith.constant 0 : index
    %1 = vector.load %arg2[%c0_1, %c0_2] : memref<768x512xbf16, #tpu.memory_space<vmem>>, vector<768x512xbf16>
    %cst = arith.constant dense<0.000000e+00> : vector<16x512xf32>
    %2 = tpu.matmul %0, %1, %cst {dimension_numbers = #tpu.dot_dimension_numbers<[1], [0], [0], [1], [0, 0, 1, 1], [], []>} : vector<16x768xbf16>, vector<768x512xbf16>, vector<16x512xf32> -> vector<16x512xf32>
    %3 = arith.truncf %2 : vector<16x512xf32> to vector<16x512xbf16>
    %c0_3 = arith.constant 0 : index
    %c0_4 = arith.constant 0 : index
    %4 = vector.load %arg3[%c0_3, %c0_4] : memref<512x256xbf16, #tpu.memory_space<vmem>>, vector<512x256xbf16>
    %cst_5 = arith.constant dense<0.000000e+00> : vector<16x256xf32>
    %5 = tpu.matmul %3, %4, %cst_5 {dimension_numbers = #tpu.dot_dimension_numbers<[1], [0], [0], [1], [0, 0, 1, 1], [], []>} : vector<16x512xbf16>, vector<512x256xbf16>, vector<16x256xf32> -> vector<16x256xf32>
    %c0_6 = arith.constant 0 : index
    %c0_7 = arith.constant 0 : index
    %6 = vector.load %arg4[%c0_6, %c0_7] : memref<1x256xf32, #tpu.memory_space<vmem>>, vector<1x256xf32>
    %7 = vector.broadcast %6 : vector<1x256xf32> to vector<16x256xf32>
    %8 = arith.addf %5, %7 : vector<16x256xf32>
    %cst_8 = arith.constant 0.000000e+00 : f32
    %9 = vector.broadcast %cst_8 : f32 to vector<16x256xf32>
    %10 = arith.maximumf %8, %9 : vector<16x256xf32>
    %11 = arith.truncf %10 : vector<16x256xf32> to vector<16x256xbf16>
    %c0_9 = arith.constant 0 : index
    %c0_10 = arith.constant 0 : index
    %12 = vector.load %arg5[%c0_9, %c0_10] : memref<256x128xbf16, #tpu.memory_space<vmem>>, vector<256x128xbf16>
    %cst_11 = arith.constant dense<0.000000e+00> : vector<16x128xf32>
    %13 = tpu.matmul %11, %12, %cst_11 {dimension_numbers = #tpu.dot_dimension_numbers<[1], [0], [0], [1], [0, 0, 1, 1], [], []>} : vector<16x256xbf16>, vector<256x128xbf16>, vector<16x128xf32> -> vector<16x128xf32>
    %c0_12 = arith.constant 0 : index
    %c0_13 = arith.constant 0 : index
    %14 = vector.load %arg6[%c0_12, %c0_13] : memref<1x128xf32, #tpu.memory_space<vmem>>, vector<1x128xf32>
    %15 = vector.broadcast %14 : vector<1x128xf32> to vector<16x128xf32>
    %16 = arith.addf %13, %15 : vector<16x128xf32>
    %c0_14 = arith.constant 0 : index
    %c0_15 = arith.constant 0 : index
    %17 = vector.load %arg7[%c0_14, %c0_15] : memref<16x128xf32, #tpu.memory_space<vmem>>, vector<16x128xf32>
    tpu.vector_store %arg7[%c0_14, %c0_15], %16 {strides = array<i32>} : memref<16x128xf32, #tpu.memory_space<vmem>>, vector<16x128xf32>,
    return
  }
  func.func @transform_0(%arg0: i32) -> (i32, i32) {
    %c0_i32 = arith.constant 0 : i32
    %c0_i32_0 = arith.constant 0 : i32
    return %arg0, %c0_i32 : i32, i32
  }
  func.func @transform_1(%arg0: i32) -> (i32, i32) {
    %c0_i32 = arith.constant 0 : i32
    %c0_i32_0 = arith.constant 0 : i32
    %c0_i32_1 = arith.constant 0 : i32
    return %c0_i32, %c0_i32_0 : i32, i32
  }
  func.func @transform_2(%arg0: i32) -> (i32, i32) {
    %c0_i32 = arith.constant 0 : i32
    %c0_i32_0 = arith.constant 0 : i32
    %c0_i32_1 = arith.constant 0 : i32
    return %c0_i32, %c0_i32_0 : i32, i32
  }
  func.func @transform_3(%arg0: i32) -> (i32, i32) {
    %c0_i32 = arith.constant 0 : i32
    %c0_i32_0 = arith.constant 0 : i32
    %c0_i32_1 = arith.constant 0 : i32
    return %c0_i32, %c0_i32_0 : i32, i32
  }
  func.func @transform_4(%arg0: i32) -> (i32, i32) {
    %c0_i32 = arith.constant 0 : i32
    %c0_i32_0 = arith.constant 0 : i32
    %c0_i32_1 = arith.constant 0 : i32
    return %c0_i32, %c0_i32_0 : i32, i32
  }
  func.func @transform_5(%arg0: i32) -> (i32, i32) {
    %c0_i32 = arith.constant 0 : i32
    %c0_i32_0 = arith.constant 0 : i32
    %c0_i32_1 = arith.constant 0 : i32
    return %c0_i32, %c0_i32_0 : i32, i32
  }
  func.func @transform_6(%arg0: i32) -> (i32, i32) {
    %c0_i32 = arith.constant 0 : i32
    %c0_i32_0 = arith.constant 0 : i32
    return %arg0, %c0_i32 : i32, i32
  }
}

</mosaic_0001>

<llo_original>
// kernel: tpu_custom_call.1
$region0: #{tpu_custom_call.1}
  #allocation0 [shape = 'u32[]', space=smem, size = 0x4, offset = 0x4, fixed_abs, tag = 'smem constant byte address 0x4 - core index']
  #allocation1 [shape = 'u32[144,128]{1,0:T(1,128)}', space=vmem, size = 0x12000, scoped, tag = 'internal scratch']
  %s0 = inlined_call_operand.hbm [shape: bf16[16,768], index: 0, kind: input, shape index: {}]
  %s1 = inlined_call_operand.hbm [shape: bf16[768,512], index: 1, kind: input, shape index: {}]
  %s2 = inlined_call_operand.hbm [shape: bf16[512,256], index: 2, kind: input, shape index: {}]
  %s3 = inlined_call_operand.vmem [shape: f32[1,256], index: 3, kind: input, shape index: {}]
  %s4 = inlined_call_operand.hbm [shape: bf16[256,128], index: 4, kind: input, shape index: {}]
  %s5 = inlined_call_operand.vmem [shape: f32[1,128], index: 5, kind: input, shape index: {}]
  %s6 = inlined_call_operand.hbm [shape: f32[16,128], index: 6, kind: output, shape index: {}]
  %s7 = sld [smem:[#allocation0]]
  $region50: #{tpu_custom_call.1} parent=0
    _
  %s9 = ssub.s32 1, %s7
  %s10 = scalar_select 0, %s9, %s7
  $region1: #{tpu_custom_call.1} parent=0
    #allocation2 [shape = 'u8[24576]{0}', space=vmem, size = 0x6000, scoped, tag = 'input window, operand 0, single buffered']
    #allocation3 [shape = 's32[1]{0}', space=sflag, size = 0x4, scoped, tag = 'scoped memory for tpu_custom_call.1']
    #allocation4 [shape = 's32[1]{0}', space=sflag, size = 0x4, scoped, tag = 'scoped memory for tpu_custom_call.1']
    #allocation5 [shape = 'u8[786432]{0}', space=vmem, size = 0xc0000, scoped, tag = 'input window, operand 1, single buffered']
    #allocation6 [shape = 's32[1]{0}', space=sflag, size = 0x4, scoped, tag = 'scoped memory for tpu_custom_call.1']
    #allocation7 [shape = 'u8[262144]{0}', space=vmem, size = 0x40000, scoped, tag = 'input window, operand 2, single buffered']
    #allocation8 [shape = 'u8[65536]{0}', space=vmem, size = 0x10000, scoped, tag = 'input window, operand 4, single buffered']
    #allocation9 [shape = 's32[1]{0}', space=sflag, size = 0x4, scoped, tag = 'scoped memory for tpu_custom_call.1']
    #allocation10 [shape = 'u8[8192]{0}', space=vmem, size = 0x2000, scoped, tag = 'output window, operand 0, single buffered']
    %11 = vsyncpa [#allocation3], 0
    %12 = vsyncpa [#allocation6], 0
    %13 = vsyncpa [#allocation9], 0
    %14 = vsyncpa [#allocation4], 0
    // Predicated region
    $region2: #{tpu_custom_call.1} parent=1 // pred_check
      _
    $region3: #{tpu_custom_call.1} parent=1 // pred_check_branch
      %16 = sbr.rel (0) target = $region5
    $region4: #{tpu_custom_call.1} parent=1 // pred_region
      %s18 = ssub.s32 768, 768
      %19 = vsyncadd [#allocation3], %s18
      %s20 = sshll.u32 [#allocation2], 4
      %s21 = int_to_ptr.vmem [resolvable:$true] %s20
      %26 = dma.hbm_to_vmem [thread:$0]  %s0, 768, %s21, [#allocation3], 384, 384, 24
    $region5: #{tpu_custom_call.1} parent=1 // pred_fallthru
      _
    // Predicated region
    $region6: #{tpu_custom_call.1} parent=1 // pred_check
      _
    $region7: #{tpu_custom_call.1} parent=1 // pred_check_branch
      %28 = sbr.rel (0) target = $region9
    $region8: #{tpu_custom_call.1} parent=1 // pred_region
      %s30 = ssub.s32 24576, 24576
      %31 = vsyncadd [#allocation6], %s30
      %s32 = sshll.u32 [#allocation5], 4
      %s33 = int_to_ptr.vmem [resolvable:$true] %s32
      %38 = dma.hbm_to_vmem [thread:$0]  %s1, 24576, %s33, [#allocation6], 256, 256, 16
    $region9: #{tpu_custom_call.1} parent=1 // pred_fallthru
      _
    // Predicated region
    $region10: #{tpu_custom_call.1} parent=1 // pred_check
      _
    $region11: #{tpu_custom_call.1} parent=1 // pred_check_branch
      %40 = sbr.rel (0) target = $region13
    $region12: #{tpu_custom_call.1} parent=1 // pred_region
      %s42 = ssub.s32 8192, 8192
      %43 = vsyncadd [#allocation6], %s42
      %s44 = sshll.u32 [#allocation7], 4
      %s45 = int_to_ptr.vmem [resolvable:$true] %s44
      %50 = dma.hbm_to_vmem [thread:$0]  %s2, 8192, %s45, [#allocation6], 128, 128, 8
    $region13: #{tpu_custom_call.1} parent=1 // pred_fallthru
      _
    // Predicated region
    $region14: #{tpu_custom_call.1} parent=1 // pred_check
      _
    $region15: #{tpu_custom_call.1} parent=1 // pred_check_branch
      %52 = sbr.rel (0) target = $region17
    $region16: #{tpu_custom_call.1} parent=1 // pred_region
      _
    $region17: #{tpu_custom_call.1} parent=1 // pred_fallthru
      _
    // Predicated region
    $region18: #{tpu_custom_call.1} parent=1 // pred_check
      _
    $region19: #{tpu_custom_call.1} parent=1 // pred_check_branch
      %54 = sbr.rel (0) target = $region21
    $region20: #{tpu_custom_call.1} parent=1 // pred_region
      %s56 = ssub.s32 2048, 2048
      %57 = vsyncadd [#allocation9], %s56
      %s58 = sshll.u32 [#allocation8], 4
      %s59 = int_to_ptr.vmem [resolvable:$true] %s58
      %64 = dma.hbm_to_vmem [thread:$0]  %s4, 2048, %s59, [#allocation9], 64, 64, 4
    $region21: #{tpu_custom_call.1} parent=1 // pred_fallthru
      _
    // Predicated region
    $region22: #{tpu_custom_call.1} parent=1 // pred_check
      _
    $region23: #{tpu_custom_call.1} parent=1 // pred_check_branch
      %66 = sbr.rel (0) target = $region25
    $region24: #{tpu_custom_call.1} parent=1 // pred_region
      _
    $region25: #{tpu_custom_call.1} parent=1 // pred_fallthru
      _
    // Predicated region
    $region26: #{tpu_custom_call.1} parent=1 // pred_check
      _
    $region27: #{tpu_custom_call.1} parent=1 // pred_check_branch
      %68 = sbr.rel (0) target = $region29
    $region28: #{tpu_custom_call.1} parent=1 // pred_region
      %69 = dma.done [#allocation3], 768
    $region29: #{tpu_custom_call.1} parent=1 // pred_fallthru
      _
    // Predicated region
    $region30: #{tpu_custom_call.1} parent=1 // pred_check
      _
    $region31: #{tpu_custom_call.1} parent=1 // pred_check_branch
      %71 = sbr.rel (0) target = $region33
    $region32: #{tpu_custom_call.1} parent=1 // pred_region
      %72 = dma.done [#allocation6], 24576
    $region33: #{tpu_custom_call.1} parent=1 // pred_fallthru
      _
    // Predicated region
    $region34: #{tpu_custom_call.1} parent=1 // pred_check
      _
    $region35: #{tpu_custom_call.1} parent=1 // pred_check_branch
      %74 = sbr.rel (0) target = $region37
    $region36: #{tpu_custom_call.1} parent=1 // pred_region
      %75 = dma.done [#allocation6], 8192
    $region37: #{tpu_custom_call.1} parent=1 // pred_fallthru
      _
    // Predicated region
    $region38: #{tpu_custom_call.1} parent=1 // pred_check
      _
    $region39: #{tpu_custom_call.1} parent=1 // pred_check_branch
      %77 = sbr.rel (0) target = $region41
    $region40: #{tpu_custom_call.1} parent=1 // pred_region
      %78 = dma.done [#allocation9], 2048
    $region41: #{tpu_custom_call.1} parent=1 // pred_fallthru
      _
    %v80 = vld [vmem:[#allocation2] sm:$0xff]
    %v81 = vld [vmem:[#allocation2 + $0x8] sm:$0xff]
    %v82 = vld [vmem:[#allocation2 + $0x10] sm:$0xff]
    %v83 = vld [vmem:[#allocation2 + $0x18] sm:$0xff]
    %v84 = vld [vmem:[#allocation2 + $0x20] sm:$0xff]
    %v85 = vld [vmem:[#allocation2 + $0x28] sm:$0xff]
    %v86 = vld [vmem:[#allocation5] sm:$0xff]
    %v87 = vld [vmem:[#allocation5 + $0x8] sm:$0xff]
    %v88 = vld [vmem:[#allocation5 + $0x10] sm:$0xff]
    %v89 = vld [vmem:[#allocation5 + $0x18] sm:$0xff]
    %v90 = vld [vmem:[#allocation5 + $0x20] sm:$0xff]
    %v91 = vld [vmem:[#allocation5 + $0x28] sm:$0xff]
    %v92 = vld [vmem:[#allocation5 + $0x30] sm:$0xff]
    %v93 = vld [vmem:[#allocation5 + $0x38] sm:$0xff]
    %v94 = vld [vmem:[#allocation5 + $0x40] sm:$0xff]
    %v95 = vld [vmem:[#allocation5 + $0x48] sm:$0xff]
    %v96 = vld [vmem:[#allocation5 + $0x50] sm:$0xff]
    %v97 = vld [vmem:[#allocation5 + $0x58] sm:$0xff]
    %v98 = vld [vmem:[#allocation5 + $0x60] sm:$0xff]
    %v99 = vld [vmem:[#allocation5 + $0x68] sm:$0xff]
    %v100 = vld [vmem:[#allocation5 + $0x70] sm:$0xff]
    %v101 = vld [vmem:[#allocation5 + $0x78] sm:$0xff]
    %v102 = vld [vmem:[#allocation5 + $0x80] sm:$0xff]
    %v103 = vld [vmem:[#allocation5 + $0x88] sm:$0xff]
    %v104 = vld [vmem:[#allocation5 + $0x90] sm:$0xff]
    %v105 = vld [vmem:[#allocation5 + $0x98] sm:$0xff]
    %v106 = vld [vmem:[#allocation5 + $0xa0] sm:$0xff]
    %v107 = vld [vmem:[#allocation5 + $0xa8] sm:$0xff]
    %v108 = vld [vmem:[#allocation5 + $0xb0] sm:$0xff]
    %v109 = vld [vmem:[#allocation5 + $0xb8] sm:$0xff]
    %v110 = vld [vmem:[#allocation5 + $0xc0] sm:$0xff]
    %v111 = vld [vmem:[#allocation5 + $0xc8] sm:$0xff]
    %v112 = vld [vmem:[#allocation5 + $0xd0] sm:$0xff]
    %v113 = vld [vmem:[#allocation5 + $0xd8] sm:$0xff]
    %v114 = vld [vmem:[#allocation5 + $0xe0] sm:$0xff]
    %v115 = vld [vmem:[#allocation5 + $0xe8] sm:$0xff]
    %v116 = vld [vmem:[#allocation5 + $0xf0] sm:$0xff]
    %v117 = vld [vmem:[#allocation5 + $0xf8] sm:$0xff]
    %v118 = vld [vmem:[#allocation5 + $0x100] sm:$0xff]
    %v119 = vld [vmem:[#allocation5 + $0x108] sm:$0xff]
    %v120 = vld [vmem:[#allocation5 + $0x110] sm:$0xff]
    %v121 = vld [vmem:[#allocation5 + $0x118] sm:$0xff]
    %v122 = vld [vmem:[#allocation5 + $0x120] sm:$0xff]
    %v123 = vld [vmem:[#allocation5 + $0x128] sm:$0xff]
    %v124 = vld [vmem:[#allocation5 + $0x130] sm:$0xff]
    %v125 = vld [vmem:[#allocation5 + $0x138] sm:$0xff]
    %v126 = vld [vmem:[#allocation5 + $0x140] sm:$0xff]
    %v127 = vld [vmem:[#allocation5 + $0x148] sm:$0xff]
    %v128 = vld [vmem:[#allocation5 + $0x150] sm:$0xff]
    %v129 = vld [vmem:[#allocation5 + $0x158] sm:$0xff]
    %v130 = vld [vmem:[#allocation5 + $0x160] sm:$0xff]
    %v131 = vld [vmem:[#allocation5 + $0x168] sm:$0xff]
    %v132 = vld [vmem:[#allocation5 + $0x170] sm:$0xff]
    %v133 = vld [vmem:[#allocation5 + $0x178] sm:$0xff]
    %v134 = vld [vmem:[#allocation5 + $0x180] sm:$0xff]
    %v135 = vld [vmem:[#allocation5 + $0x188] sm:$0xff]
    %v136 = vld [vmem:[#allocation5 + $0x190] sm:$0xff]
    %v137 = vld [vmem:[#allocation5 + $0x198] sm:$0xff]
    %v138 = vld [vmem:[#allocation5 + $0x1a0] sm:$0xff]
    %v139 = vld [vmem:[#allocation5 + $0x1a8] sm:$0xff]
    %v140 = vld [vmem:[#allocation5 + $0x1b0] sm:$0xff]
    %v141 = vld [vmem:[#allocation5 + $0x1b8] sm:$0xff]
    %v142 = vld [vmem:[#allocation5 + $0x1c0] sm:$0xff]
    %v143 = vld [vmem:[#allocation5 + $0x1c8] sm:$0xff]
    %v144 = vld [vmem:[#allocation5 + $0x1d0] sm:$0xff]
    %v145 = vld [vmem:[#allocation5 + $0x1d8] sm:$0xff]
    %v146 = vld [vmem:[#allocation5 + $0x1e0] sm:$0xff]
    %v147 = vld [vmem:[#allocation5 + $0x1e8] sm:$0xff]
    %v148 = vld [vmem:[#allocation5 + $0x1f0] sm:$0xff]
    %v149 = vld [vmem:[#allocation5 + $0x1f8] sm:$0xff]
    %v150 = vld [vmem:[#allocation5 + $0x200] sm:$0xff]
    %v151 = vld [vmem:[#allocation5 + $0x208] sm:$0xff]
    %v152 = vld [vmem:[#allocation5 + $0x210] sm:$0xff]
    %v153 = vld [vmem:[#allocation5 + $0x218] sm:$0xff]
    %v154 = vld [vmem:[#allocation5 + $0x220] sm:$0xff]
    %v155 = vld [vmem:[#allocation5 + $0x228] sm:$0xff]
    %v156 = vld [vmem:[#allocation5 + $0x230] sm:$0xff]
    %v157 = vld [vmem:[#allocation5 + $0x238] sm:$0xff]
    %v158 = vld [vmem:[#allocation5 + $0x240] sm:$0xff]
    %v159 = vld [vmem:[#allocation5 + $0x248] sm:$0xff]
    %v160 = vld [vmem:[#allocation5 + $0x250] sm:$0xff]
    %v161 = vld [vmem:[#allocation5 + $0x258] sm:$0xff]
    %v162 = vld [vmem:[#allocation5 + $0x260] sm:$0xff]
    %v163 = vld [vmem:[#allocation5 + $0x268] sm:$0xff]
    %v164 = vld [vmem:[#allocation5 + $0x270] sm:$0xff]
    %v165 = vld [vmem:[#allocation5 + $0x278] sm:$0xff]
    %v166 = vld [vmem:[#allocation5 + $0x280] sm:$0xff]
    %v167 = vld [vmem:[#allocation5 + $0x288] sm:$0xff]
    %v168 = vld [vmem:[#allocation5 + $0x290] sm:$0xff]
    %v169 = vld [vmem:[#allocation5 + $0x298] sm:$0xff]
    %v170 = vld [vmem:[#allocation5 + $0x2a0] sm:$0xff]
    %v171 = vld [vmem:[#allocation5 + $0x2a8] sm:$0xff]
    %v172 = vld [vmem:[#allocation5 + $0x2b0] sm:$0xff]
    %v173 = vld [vmem:[#allocation5 + $0x2b8] sm:$0xff]
    %v174 = vld [vmem:[#allocation5 + $0x2c0] sm:$0xff]
    %v175 = vld [vmem:[#allocation5 + $0x2c8] sm:$0xff]
    %v176 = vld [vmem:[#allocation5 + $0x2d0] sm:$0xff]
    %v177 = vld [vmem:[#allocation5 + $0x2d8] sm:$0xff]
    %v178 = vld [vmem:[#allocation5 + $0x2e0] sm:$0xff]
    %v179 = vld [vmem:[#allocation5 + $0x2e8] sm:$0xff]
    %v180 = vld [vmem:[#allocation5 + $0x2f0] sm:$0xff]
    %v181 = vld [vmem:[#allocation5 + $0x2f8] sm:$0xff]
    %v182 = vld [vmem:[#allocation5 + $0x300] sm:$0xff]
    %v183 = vld [vmem:[#allocation5 + $0x308] sm:$0xff]
    %v184 = vld [vmem:[#allocation5 + $0x310] sm:$0xff]
    %v185 = vld [vmem:[#allocation5 + $0x318] sm:$0xff]
    %v186 = vld [vmem:[#allocation5 + $0x320] sm:$0xff]
    %v187 = vld [vmem:[#allocation5 + $0x328] sm:$0xff]
    %v188 = vld [vmem:[#allocation5 + $0x330] sm:$0xff]
    %v189 = vld [vmem:[#allocation5 + $0x338] sm:$0xff]
    %v190 = vld [vmem:[#allocation5 + $0x340] sm:$0xff]
    %v191 = vld [vmem:[#allocation5 + $0x348] sm:$0xff]
    %v192 = vld [vmem:[#allocation5 + $0x350] sm:$0xff]
    %v193 = vld [vmem:[#allocation5 + $0x358] sm:$0xff]
    %v194 = vld [vmem:[#allocation5 + $0x360] sm:$0xff]
    %v195 = vld [vmem:[#allocation5 + $0x368] sm:$0xff]
    %v196 = vld [vmem:[#allocation5 + $0x370] sm:$0xff]
    %v197 = vld [vmem:[#allocation5 + $0x378] sm:$0xff]
    %v198 = vld [vmem:[#allocation5 + $0x380] sm:$0xff]
    %v199 = vld [vmem:[#allocation5 + $0x388] sm:$0xff]
    %v200 = vld [vmem:[#allocation5 + $0x390] sm:$0xff]
    %v201 = vld [vmem:[#allocation5 + $0x398] sm:$0xff]
    %v202 = vld [vmem:[#allocation5 + $0x3a0] sm:$0xff]
    %v203 = vld [vmem:[#allocation5 + $0x3a8] sm:$0xff]
    %v204 = vld [vmem:[#allocation5 + $0x3b0] sm:$0xff]
    %v205 = vld [vmem:[#allocation5 + $0x3b8] sm:$0xff]
    %v206 = vld [vmem:[#allocation5 + $0x3c0] sm:$0xff]
    %v207 = vld [vmem:[#allocation5 + $0x3c8] sm:$0xff]
    %v208 = vld [vmem:[#allocation5 + $0x3d0] sm:$0xff]
    %v209 = vld [vmem:[#allocation5 + $0x3d8] sm:$0xff]
    %v210 = vld [vmem:[#allocation5 + $0x3e0] sm:$0xff]
    %v211 = vld [vmem:[#allocation5 + $0x3e8] sm:$0xff]
    %v212 = vld [vmem:[#allocation5 + $0x3f0] sm:$0xff]
    %v213 = vld [vmem:[#allocation5 + $0x3f8] sm:$0xff]
    %v214 = vld [vmem:[#allocation5 + $0x400] sm:$0xff]
    %v215 = vld [vmem:[#allocation5 + $0x408] sm:$0xff]
    %v216 = vld [vmem:[#allocation5 + $0x410] sm:$0xff]
    %v217 = vld [vmem:[#allocation5 + $0x418] sm:$0xff]
    %v218 = vld [vmem:[#allocation5 + $0x420] sm:$0xff]
    %v219 = vld [vmem:[#allocation5 + $0x428] sm:$0xff]
    %v220 = vld [vmem:[#allocation5 + $0x430] sm:$0xff]
    %v221 = vld [vmem:[#allocation5 + $0x438] sm:$0xff]
    %v222 = vld [vmem:[#allocation5 + $0x440] sm:$0xff]
    %v223 = vld [vmem:[#allocation5 + $0x448] sm:$0xff]
    %v224 = vld [vmem:[#allocation5 + $0x450] sm:$0xff]
    %v225 = vld [vmem:[#allocation5 + $0x458] sm:$0xff]
    %v226 = vld [vmem:[#allocation5 + $0x460] sm:$0xff]
    %v227 = vld [vmem:[#allocation5 + $0x468] sm:$0xff]
    %v228 = vld [vmem:[#allocation5 + $0x470] sm:$0xff]
    %v229 = vld [vmem:[#allocation5 + $0x478] sm:$0xff]
    %v230 = vld [vmem:[#allocation5 + $0x480] sm:$0xff]
    %v231 = vld [vmem:[#allocation5 + $0x488] sm:$0xff]
    %v232 = vld [vmem:[#allocation5 + $0x490] sm:$0xff]
    %v233 = vld [vmem:[#allocation5 + $0x498] sm:$0xff]
    %v234 = vld [vmem:[#allocation5 + $0x4a0] sm:$0xff]
    %v235 = vld [vmem:[#allocation5 + $0x4a8] sm:$0xff]
    %v236 = vld [vmem:[#allocation5 + $0x4b0] sm:$0xff]
    %v237 = vld [vmem:[#allocation5 + $0x4b8] sm:$0xff]
    %v238 = vld [vmem:[#allocation5 + $0x4c0] sm:$0xff]
    %v239 = vld [vmem:[#allocation5 + $0x4c8] sm:$0xff]
    %v240 = vld [vmem:[#allocation5 + $0x4d0] sm:$0xff]
    %v241 = vld [vmem:[#allocation5 + $0x4d8] sm:$0xff]
    %v242 = vld [vmem:[#allocation5 + $0x4e0] sm:$0xff]
    %v243 = vld [vmem:[#allocation5 + $0x4e8] sm:$0xff]
    %v244 = vld [vmem:[#allocation5 + $0x4f0] sm:$0xff]
    %v245 = vld [vmem:[#allocation5 + $0x4f8] sm:$0xff]
    %v246 = vld [vmem:[#allocation5 + $0x500] sm:$0xff]
    %v247 = vld [vmem:[#allocation5 + $0x508] sm:$0xff]
    %v248 = vld [vmem:[#allocation5 + $0x510] sm:$0xff]
    %v249 = vld [vmem:[#allocation5 + $0x518] sm:$0xff]
    %v250 = vld [vmem:[#allocation5 + $0x520] sm:$0xff]
    %v251 = vld [vmem:[#allocation5 + $0x528] sm:$0xff]
    %v252 = vld [vmem:[#allocation5 + $0x530] sm:$0xff]
    %v253 = vld [vmem:[#allocation5 + $0x538] sm:$0xff]
    %v254 = vld [vmem:[#allocation5 + $0x540] sm:$0xff]
    %v255 = vld [vmem:[#allocation5 + $0x548] sm:$0xff]
    %v256 = vld [vmem:[#allocation5 + $0x550] sm:$0xff]
    %v257 = vld [vmem:[#allocation5 + $0x558] sm:$0xff]
    %v258 = vld [vmem:[#allocation5 + $0x560] sm:$0xff]
    %v259 = vld [vmem:[#allocation5 + $0x568] sm:$0xff]
    %v260 = vld [vmem:[#allocation5 + $0x570] sm:$0xff]
    %v261 = vld [vmem:[#allocation5 + $0x578] sm:$0xff]
    %v262 = vld [vmem:[#allocation5 + $0x580] sm:$0xff]
    %v263 = vld [vmem:[#allocation5 + $0x588] sm:$0xff]
    %v264 = vld [vmem:[#allocation5 + $0x590] sm:$0xff]
    %v265 = vld [vmem:[#allocation5 + $0x598] sm:$0xff]
    %v266 = vld [vmem:[#allocation5 + $0x5a0] sm:$0xff]
    %v267 = vld [vmem:[#allocation5 + $0x5a8] sm:$0xff]
    %v268 = vld [vmem:[#allocation5 + $0x5b0] sm:$0xff]
    %v269 = vld [vmem:[#allocation5 + $0x5b8] sm:$0xff]
    %v270 = vld [vmem:[#allocation5 + $0x5c0] sm:$0xff]
    %v271 = vld [vmem:[#allocation5 + $0x5c8] sm:$0xff]
    %v272 = vld [vmem:[#allocation5 + $0x5d0] sm:$0xff]
    %v273 = vld [vmem:[#allocation5 + $0x5d8] sm:$0xff]
    %v274 = vld [vmem:[#allocation5 + $0x5e0] sm:$0xff]
    %v275 = vld [vmem:[#allocation5 + $0x5e8] sm:$0xff]
    %v276 = vld [vmem:[#allocation5 + $0x5f0] sm:$0xff]
    %v277 = vld [vmem:[#allocation5 + $0x5f8] sm:$0xff]
    %v284 = vunpack.c.l.b16 %v80
    %v285 = vunpack.c.h.b16 %v80
    %v286 = vunpack.c.l.b16 %v81
    %v287 = vunpack.c.h.b16 %v81
    %v288 = vunpack.c.l.b16 %v82
    %v289 = vunpack.c.h.b16 %v82
    %v290 = vunpack.c.l.b16 %v83
    %v291 = vunpack.c.h.b16 %v83
    %v292 = vunpack.c.l.b16 %v84
    %v293 = vunpack.c.h.b16 %v84
    %v294 = vunpack.c.l.b16 %v85
    %v295 = vunpack.c.h.b16 %v85
    %v296 = vpack.c.b16 %v290, %v284
    %v297 = vpack.c.b16 %v291, %v285
    %v298 = vpack.c.b16 %v292, %v286
    %v299 = vpack.c.b16 %v293, %v287
    %v300 = vpack.c.b16 %v294, %v288
    %v301 = vpack.c.b16 %v295, %v289
    %v500 = vunpack.c.l.b16 %v86
    %v501 = vunpack.c.h.b16 %v86
    %v502 = vunpack.c.l.b16 %v87
    %v503 = vunpack.c.h.b16 %v87
    %v504 = vunpack.c.l.b16 %v88
    %v505 = vunpack.c.h.b16 %v88
    %v506 = vunpack.c.l.b16 %v89
    %v507 = vunpack.c.h.b16 %v89
    %v508 = vunpack.c.l.b16 %v90
    %v509 = vunpack.c.h.b16 %v90
    %v510 = vunpack.c.l.b16 %v91
    %v511 = vunpack.c.h.b16 %v91
    %v512 = vunpack.c.l.b16 %v92
    %v513 = vunpack.c.h.b16 %v92
    %v514 = vunpack.c.l.b16 %v93
    %v515 = vunpack.c.h.b16 %v93
    %v516 = vunpack.c.l.b16 %v94
    %v517 = vunpack.c.h.b16 %v94
    %v518 = vunpack.c.l.b16 %v95
    %v519 = vunpack.c.h.b16 %v95
    %v520 = vunpack.c.l.b16 %v96
    %v521 = vunpack.c.h.b16 %v96
    %v522 = vunpack.c.l.b16 %v97
    %v523 = vunpack.c.h.b16 %v97
    %v524 = vunpack.c.l.b16 %v98
    %v525 = vunpack.c.h.b16 %v98
    %v526 = vunpack.c.l.b16 %v99
    %v527 = vunpack.c.h.b16 %v99
    %v528 = vunpack.c.l.b16 %v100
    %v529 = vunpack.c.h.b16 %v100
    %v530 = vunpack.c.l.b16 %v101
    %v531 = vunpack.c.h.b16 %v101
    %v532 = vunpack.c.l.b16 %v102
    %v533 = vunpack.c.h.b16 %v102
    %v534 = vunpack.c.l.b16 %v103
    %v535 = vunpack.c.h.b16 %v103
    %v536 = vunpack.c.l.b16 %v104
    %v537 = vunpack.c.h.b16 %v104
    %v538 = vunpack.c.l.b16 %v105
    %v539 = vunpack.c.h.b16 %v105
    %v540 = vunpack.c.l.b16 %v106
    %v541 = vunpack.c.h.b16 %v106
    %v542 = vunpack.c.l.b16 %v107
    %v543 = vunpack.c.h.b16 %v107
    %v544 = vunpack.c.l.b16 %v108
    %v545 = vunpack.c.h.b16 %v108
    %v546 = vunpack.c.l.b16 %v109
    %v547 = vunpack.c.h.b16 %v109
    %v548 = vunpack.c.l.b16 %v110
    %v549 = vunpack.c.h.b16 %v110
    %v550 = vunpack.c.l.b16 %v111
    %v551 = vunpack.c.h.b16 %v111
    %v552 = vunpack.c.l.b16 %v112
    %v553 = vunpack.c.h.b16 %v112
    %v554 = vunpack.c.l.b16 %v113
    %v555 = vunpack.c.h.b16 %v113
    %v556 = vunpack.c.l.b16 %v114
    %v557 = vunpack.c.h.b16 %v114
    %v558 = vunpack.c.l.b16 %v115
    %v559 = vunpack.c.h.b16 %v115
    %v560 = vunpack.c.l.b16 %v116
    %v561 = vunpack.c.h.b16 %v116
    %v562 = vunpack.c.l.b16 %v117
    %v563 = vunpack.c.h.b16 %v117
    %v564 = vunpack.c.l.b16 %v118
    %v565 = vunpack.c.h.b16 %v118
    %v566 = vunpack.c.l.b16 %v119
    %v567 = vunpack.c.h.b16 %v119
    %v568 = vunpack.c.l.b16 %v120
    %v569 = vunpack.c.h.b16 %v120
    %v570 = vunpack.c.l.b16 %v121
    %v571 = vunpack.c.h.b16 %v121
    %v572 = vunpack.c.l.b16 %v122
    %v573 = vunpack.c.h.b16 %v122
    %v574 = vunpack.c.l.b16 %v123
    %v575 = vunpack.c.h.b16 %v123
    %v576 = vunpack.c.l.b16 %v124
    %v577 = vunpack.c.h.b16 %v124
    %v578 = vunpack.c.l.b16 %v125
    %v579 = vunpack.c.h.b16 %v125
    %v580 = vunpack.c.l.b16 %v126
    %v581 = vunpack.c.h.b16 %v126
    %v582 = vunpack.c.l.b16 %v127
    %v583 = vunpack.c.h.b16 %v127
    %v584 = vunpack.c.l.b16 %v128
    %v585 = vunpack.c.h.b16 %v128
    %v586 = vunpack.c.l.b16 %v129
    %v587 = vunpack.c.h.b16 %v129
    %v588 = vunpack.c.l.b16 %v130
    %v589 = vunpack.c.h.b16 %v130
    %v590 = vunpack.c.l.b16 %v131
    %v591 = vunpack.c.h.b16 %v131
    %v592 = vunpack.c.l.b16 %v132
    %v593 = vunpack.c.h.b16 %v132
    %v594 = vunpack.c.l.b16 %v133
    %v595 = vunpack.c.h.b16 %v133
    %v596 = vunpack.c.l.b16 %v134
    %v597 = vunpack.c.h.b16 %v134
    %v598 = vunpack.c.l.b16 %v135
    %v599 = vunpack.c.h.b16 %v135
    %v600 = vunpack.c.l.b16 %v136
    %v601 = vunpack.c.h.b16 %v136
    %v602 = vunpack.c.l.b16 %v137
    %v603 = vunpack.c.h.b16 %v137
    %v604 = vunpack.c.l.b16 %v138
    %v605 = vunpack.c.h.b16 %v138
    %v606 = vunpack.c.l.b16 %v139
    %v607 = vunpack.c.h.b16 %v139
    %v608 = vunpack.c.l.b16 %v140
    %v609 = vunpack.c.h.b16 %v140
    %v610 = vunpack.c.l.b16 %v141
    %v611 = vunpack.c.h.b16 %v141
    %v612 = vunpack.c.l.b16 %v142
    %v613 = vunpack.c.h.b16 %v142
    %v614 = vunpack.c.l.b16 %v143
    %v615 = vunpack.c.h.b16 %v143
    %v616 = vunpack.c.l.b16 %v144
    %v617 = vunpack.c.h.b16 %v144
    %v618 = vunpack.c.l.b16 %v145
    %v619 = vunpack.c.h.b16 %v145
    %v620 = vunpack.c.l.b16 %v146
    %v621 = vunpack.c.h.b16 %v146
    %v622 = vunpack.c.l.b16 %v147
    %v623 = vunpack.c.h.b16 %v147
    %v624 = vunpack.c.l.b16 %v148
    %v625 = vunpack.c.h.b16 %v148
    %v626 = vunpack.c.l.b16 %v149
    %v627 = vunpack.c.h.b16 %v149
    %v628 = vunpack.c.l.b16 %v150
    %v629 = vunpack.c.h.b16 %v150
    %v630 = vunpack.c.l.b16 %v151
    %v631 = vunpack.c.h.b16 %v151
    %v632 = vunpack.c.l.b16 %v152
    %v633 = vunpack.c.h.b16 %v152
    %v634 = vunpack.c.l.b16 %v153
    %v635 = vunpack.c.h.b16 %v153
    %v636 = vunpack.c.l.b16 %v154
    %v637 = vunpack.c.h.b16 %v154
    %v638 = vunpack.c.l.b16 %v155
    %v639 = vunpack.c.h.b16 %v155
    %v640 = vunpack.c.l.b16 %v156
    %v641 = vunpack.c.h.b16 %v156
    %v642 = vunpack.c.l.b16 %v157
    %v643 = vunpack.c.h.b16 %v157
    %v644 = vunpack.c.l.b16 %v158
    %v645 = vunpack.c.h.b16 %v158
    %v646 = vunpack.c.l.b16 %v159
    %v647 = vunpack.c.h.b16 %v159
    %v648 = vunpack.c.l.b16 %v160
    %v649 = vunpack.c.h.b16 %v160
    %v650 = vunpack.c.l.b16 %v161
    %v651 = vunpack.c.h.b16 %v161
    %v652 = vunpack.c.l.b16 %v162
    %v653 = vunpack.c.h.b16 %v162
    %v654 = vunpack.c.l.b16 %v163
    %v655 = vunpack.c.h.b16 %v163
    %v656 = vunpack.c.l.b16 %v164
    %v657 = vunpack.c.h.b16 %v164
    %v658 = vunpack.c.l.b16 %v165
    %v659 = vunpack.c.h.b16 %v165
    %v660 = vunpack.c.l.b16 %v166
    %v661 = vunpack.c.h.b16 %v166
    %v662 = vunpack.c.l.b16 %v167
    %v663 = vunpack.c.h.b16 %v167
    %v664 = vunpack.c.l.b16 %v168
    %v665 = vunpack.c.h.b16 %v168
    %v666 = vunpack.c.l.b16 %v169
    %v667 = vunpack.c.h.b16 %v169
    %v668 = vunpack.c.l.b16 %v170
    %v669 = vunpack.c.h.b16 %v170
    %v670 = vunpack.c.l.b16 %v171
    %v671 = vunpack.c.h.b16 %v171
    %v672 = vunpack.c.l.b16 %v172
    %v673 = vunpack.c.h.b16 %v172
    %v674 = vunpack.c.l.b16 %v173
    %v675 = vunpack.c.h.b16 %v173
    %v676 = vunpack.c.l.b16 %v174
    %v677 = vunpack.c.h.b16 %v174
    %v678 = vunpack.c.l.b16 %v175
    %v679 = vunpack.c.h.b16 %v175
    %v680 = vunpack.c.l.b16 %v176
    %v681 = vunpack.c.h.b16 %v176
    %v682 = vunpack.c.l.b16 %v177
    %v683 = vunpack.c.h.b16 %v177
    %v684 = vunpack.c.l.b16 %v178
    %v685 = vunpack.c.h.b16 %v178
    %v686 = vunpack.c.l.b16 %v179
    %v687 = vunpack.c.h.b16 %v179
    %v688 = vunpack.c.l.b16 %v180
    %v689 = vunpack.c.h.b16 %v180
    %v690 = vunpack.c.l.b16 %v181
    %v691 = vunpack.c.h.b16 %v181
    %v692 = vunpack.c.l.b16 %v182
    %v693 = vunpack.c.h.b16 %v182
    %v694 = vunpack.c.l.b16 %v183
    %v695 = vunpack.c.h.b16 %v183
    %v696 = vunpack.c.l.b16 %v184
    %v697 = vunpack.c.h.b16 %v184
    %v698 = vunpack.c.l.b16 %v185
    %v699 = vunpack.c.h.b16 %v185
    %v700 = vunpack.c.l.b16 %v186
    %v701 = vunpack.c.h.b16 %v186
    %v702 = vunpack.c.l.b16 %v187
    %v703 = vunpack.c.h.b16 %v187
    %v704 = vunpack.c.l.b16 %v188
    %v705 = vunpack.c.h.b16 %v188
    %v706 = vunpack.c.l.b16 %v189
    %v707 = vunpack.c.h.b16 %v189
    %v708 = vunpack.c.l.b16 %v190
    %v709 = vunpack.c.h.b16 %v190
    %v710 = vunpack.c.l.b16 %v191
    %v711 = vunpack.c.h.b16 %v191
    %v712 = vunpack.c.l.b16 %v192
    %v713 = vunpack.c.h.b16 %v192
    %v714 = vunpack.c.l.b16 %v193
    %v715 = vunpack.c.h.b16 %v193
    %v716 = vunpack.c.l.b16 %v194
    %v717 = vunpack.c.h.b16 %v194
    %v718 = vunpack.c.l.b16 %v195
    %v719 = vunpack.c.h.b16 %v195
    %v720 = vunpack.c.l.b16 %v196
    %v721 = vunpack.c.h.b16 %v196
    %v722 = vunpack.c.l.b16 %v197
    %v723 = vunpack.c.h.b16 %v197
    %v724 = vunpack.c.l.b16 %v198
    %v725 = vunpack.c.h.b16 %v198
    %v726 = vunpack.c.l.b16 %v199
    %v727 = vunpack.c.h.b16 %v199
    %v728 = vunpack.c.l.b16 %v200
    %v729 = vunpack.c.h.b16 %v200
    %v730 = vunpack.c.l.b16 %v201
    %v731 = vunpack.c.h.b16 %v201
    %v732 = vunpack.c.l.b16 %v202
    %v733 = vunpack.c.h.b16 %v202
    %v734 = vunpack.c.l.b16 %v203
    %v735 = vunpack.c.h.b16 %v203
    %v736 = vunpack.c.l.b16 %v204
    %v737 = vunpack.c.h.b16 %v204
    %v738 = vunpack.c.l.b16 %v205
    %v739 = vunpack.c.h.b16 %v205
    %v740 = vunpack.c.l.b16 %v206
    %v741 = vunpack.c.h.b16 %v206
    %v742 = vunpack.c.l.b16 %v207
    %v743 = vunpack.c.h.b16 %v207
    %v744 = vunpack.c.l.b16 %v208
    %v745 = vunpack.c.h.b16 %v208
    %v746 = vunpack.c.l.b16 %v209
    %v747 = vunpack.c.h.b16 %v209
    %v748 = vunpack.c.l.b16 %v210
    %v749 = vunpack.c.h.b16 %v210
    %v750 = vunpack.c.l.b16 %v211
    %v751 = vunpack.c.h.b16 %v211
    %v752 = vunpack.c.l.b16 %v212
    %v753 = vunpack.c.h.b16 %v212
    %v754 = vunpack.c.l.b16 %v213
    %v755 = vunpack.c.h.b16 %v213
    %v756 = vunpack.c.l.b16 %v214
    %v757 = vunpack.c.h.b16 %v214
    %v758 = vunpack.c.l.b16 %v215
    %v759 = vunpack.c.h.b16 %v215
    %v760 = vunpack.c.l.b16 %v216
    %v761 = vunpack.c.h.b16 %v216
    %v762 = vunpack.c.l.b16 %v217
    %v763 = vunpack.c.h.b16 %v217
    %v764 = vunpack.c.l.b16 %v218
    %v765 = vunpack.c.h.b16 %v218
    %v766 = vunpack.c.l.b16 %v219
    %v767 = vunpack.c.h.b16 %v219
    %v768 = vunpack.c.l.b16 %v220
    %v769 = vunpack.c.h.b16 %v220
    %v770 = vunpack.c.l.b16 %v221
    %v771 = vunpack.c.h.b16 %v221
    %v772 = vunpack.c.l.b16 %v222
    %v773 = vunpack.c.h.b16 %v222
    %v774 = vunpack.c.l.b16 %v223
    %v775 = vunpack.c.h.b16 %v223
    %v776 = vunpack.c.l.b16 %v224
    %v777 = vunpack.c.h.b16 %v224
    %v778 = vunpack.c.l.b16 %v225
    %v779 = vunpack.c.h.b16 %v225
    %v780 = vunpack.c.l.b16 %v226
    %v781 = vunpack.c.h.b16 %v226
    %v782 = vunpack.c.l.b16 %v227
    %v783 = vunpack.c.h.b16 %v227
    %v784 = vunpack.c.l.b16 %v228
    %v785 = vunpack.c.h.b16 %v228
    %v786 = vunpack.c.l.b16 %v229
    %v787 = vunpack.c.h.b16 %v229
    %v788 = vunpack.c.l.b16 %v230
    %v789 = vunpack.c.h.b16 %v230
    %v790 = vunpack.c.l.b16 %v231
    %v791 = vunpack.c.h.b16 %v231
    %v792 = vunpack.c.l.b16 %v232
    %v793 = vunpack.c.h.b16 %v232
    %v794 = vunpack.c.l.b16 %v233
    %v795 = vunpack.c.h.b16 %v233
    %v796 = vunpack.c.l.b16 %v234
    %v797 = vunpack.c.h.b16 %v234
    %v798 = vunpack.c.l.b16 %v235
    %v799 = vunpack.c.h.b16 %v235
    %v800 = vunpack.c.l.b16 %v236
    %v801 = vunpack.c.h.b16 %v236
    %v802 = vunpack.c.l.b16 %v237
    %v803 = vunpack.c.h.b16 %v237
    %v804 = vunpack.c.l.b16 %v238
    %v805 = vunpack.c.h.b16 %v238
    %v806 = vunpack.c.l.b16 %v239
    %v807 = vunpack.c.h.b16 %v239
    %v808 = vunpack.c.l.b16 %v240
    %v809 = vunpack.c.h.b16 %v240
    %v810 = vunpack.c.l.b16 %v241
    %v811 = vunpack.c.h.b16 %v241
    %v812 = vunpack.c.l.b16 %v242
    %v813 = vunpack.c.h.b16 %v242
    %v814 = vunpack.c.l.b16 %v243
    %v815 = vunpack.c.h.b16 %v243
    %v816 = vunpack.c.l.b16 %v244
    %v817 = vunpack.c.h.b16 %v244
    %v818 = vunpack.c.l.b16 %v245
    %v819 = vunpack.c.h.b16 %v245
    %v820 = vunpack.c.l.b16 %v246
    %v821 = vunpack.c.h.b16 %v246
    %v822 = vunpack.c.l.b16 %v247
    %v823 = vunpack.c.h.b16 %v247
    %v824 = vunpack.c.l.b16 %v248
    %v825 = vunpack.c.h.b16 %v248
    %v826 = vunpack.c.l.b16 %v249
    %v827 = vunpack.c.h.b16 %v249
    %v828 = vunpack.c.l.b16 %v250
    %v829 = vunpack.c.h.b16 %v250
    %v830 = vunpack.c.l.b16 %v251
    %v831 = vunpack.c.h.b16 %v251
    %v832 = vunpack.c.l.b16 %v252
    %v833 = vunpack.c.h.b16 %v252
    %v834 = vunpack.c.l.b16 %v253
    %v835 = vunpack.c.h.b16 %v253
    %v836 = vunpack.c.l.b16 %v254
    %v837 = vunpack.c.h.b16 %v254
    %v838 = vunpack.c.l.b16 %v255
    %v839 = vunpack.c.h.b16 %v255
    %v840 = vunpack.c.l.b16 %v256
    %v841 = vunpack.c.h.b16 %v256
    %v842 = vunpack.c.l.b16 %v257
    %v843 = vunpack.c.h.b16 %v257
    %v844 = vunpack.c.l.b16 %v258
    %v845 = vunpack.c.h.b16 %v258
    %v846 = vunpack.c.l.b16 %v259
    %v847 = vunpack.c.h.b16 %v259
    %v848 = vunpack.c.l.b16 %v260
    %v849 = vunpack.c.h.b16 %v260
    %v850 = vunpack.c.l.b16 %v261
    %v851 = vunpack.c.h.b16 %v261
    %v852 = vunpack.c.l.b16 %v262
    %v853 = vunpack.c.h.b16 %v262
    %v854 = vunpack.c.l.b16 %v263
    %v855 = vunpack.c.h.b16 %v263
    %v856 = vunpack.c.l.b16 %v264
    %v857 = vunpack.c.h.b16 %v264
    %v858 = vunpack.c.l.b16 %v265
    %v859 = vunpack.c.h.b16 %v265
    %v860 = vunpack.c.l.b16 %v266
    %v861 = vunpack.c.h.b16 %v266
    %v862 = vunpack.c.l.b16 %v267
    %v863 = vunpack.c.h.b16 %v267
    %v864 = vunpack.c.l.b16 %v268
    %v865 = vunpack.c.h.b16 %v268
    %v866 = vunpack.c.l.b16 %v269
    %v867 = vunpack.c.h.b16 %v269
    %v868 = vunpack.c.l.b16 %v270
    %v869 = vunpack.c.h.b16 %v270
    %v870 = vunpack.c.l.b16 %v271
    %v871 = vunpack.c.h.b16 %v271
    %v872 = vunpack.c.l.b16 %v272
    %v873 = vunpack.c.h.b16 %v272
    %v874 = vunpack.c.l.b16 %v273
    %v875 = vunpack.c.h.b16 %v273
    %v876 = vunpack.c.l.b16 %v274
    %v877 = vunpack.c.h.b16 %v274
    %v878 = vunpack.c.l.b16 %v275
    %v879 = vunpack.c.h.b16 %v275
    %v880 = vunpack.c.l.b16 %v276
    %v881 = vunpack.c.h.b16 %v276
    %v882 = vunpack.c.l.b16 %v277
    %v883 = vunpack.c.h.b16 %v277
    %v884 = vpack.c.b16 %v504, %v500
    %v885 = vpack.c.b16 %v505, %v501
    %v886 = vpack.c.b16 %v506, %v502
    %v887 = vpack.c.b16 %v507, %v503
    %v888 = vpack.c.b16 %v512, %v508
    %v889 = vpack.c.b16 %v513, %v509
    %v890 = vpack.c.b16 %v514, %v510
    %v891 = vpack.c.b16 %v515, %v511
    %v892 = vpack.c.b16 %v520, %v516
    %v893 = vpack.c.b16 %v521, %v517
    %v894 = vpack.c.b16 %v522, %v518
    %v895 = vpack.c.b16 %v523, %v519
    %v896 = vpack.c.b16 %v528, %v524
    %v897 = vpack.c.b16 %v529, %v525
    %v898 = vpack.c.b16 %v530, %v526
    %v899 = vpack.c.b16 %v531, %v527
    %v900 = vpack.c.b16 %v536, %v532
    %v901 = vpack.c.b16 %v537, %v533
    %v902 = vpack.c.b16 %v538, %v534
    %v903 = vpack.c.b16 %v539, %v535
    %v904 = vpack.c.b16 %v544, %v540
    %v905 = vpack.c.b16 %v545, %v541
    %v906 = vpack.c.b16 %v546, %v542
    %v907 = vpack.c.b16 %v547, %v543
    %v908 = vpack.c.b16 %v552, %v548
    %v909 = vpack.c.b16 %v553, %v549
    %v910 = vpack.c.b16 %v554, %v550
    %v911 = vpack.c.b16 %v555, %v551
    %v912 = vpack.c.b16 %v560, %v556
    %v913 = vpack.c.b16 %v561, %v557
    %v914 = vpack.c.b16 %v562, %v558
    %v915 = vpack.c.b16 %v563, %v559
    %v916 = vpack.c.b16 %v568, %v564
    %v917 = vpack.c.b16 %v569, %v565
    %v918 = vpack.c.b16 %v570, %v566
    %v919 = vpack.c.b16 %v571, %v567
    %v920 = vpack.c.b16 %v576, %v572
    %v921 = vpack.c.b16 %v577, %v573
    %v922 = vpack.c.b16 %v578, %v574
    %v923 = vpack.c.b16 %v579, %v575
    %v924 = vpack.c.b16 %v584, %v580
    %v925 = vpack.c.b16 %v585, %v581
    %v926 = vpack.c.b16 %v586, %v582
    %v927 = vpack.c.b16 %v587, %v583
    %v928 = vpack.c.b16 %v592, %v588
    %v929 = vpack.c.b16 %v593, %v589
    %v930 = vpack.c.b16 %v594, %v590
    %v931 = vpack.c.b16 %v595, %v591
    %v932 = vpack.c.b16 %v600, %v596
    %v933 = vpack.c.b16 %v601, %v597
    %v934 = vpack.c.b16 %v602, %v598
    %v935 = vpack.c.b16 %v603, %v599
    %v936 = vpack.c.b16 %v608, %v604
    %v937 = vpack.c.b16 %v609, %v605
    %v938 = vpack.c.b16 %v610, %v606
    %v939 = vpack.c.b16 %v611, %v607
    %v940 = vpack.c.b16 %v616, %v612
    %v941 = vpack.c.b16 %v617, %v613
    %v942 = vpack.c.b16 %v618, %v614
    %v943 = vpack.c.b16 %v619, %v615
    %v944 = vpack.c.b16 %v624, %v620
    %v945 = vpack.c.b16 %v625, %v621
    %v946 = vpack.c.b16 %v626, %v622
    %v947 = vpack.c.b16 %v627, %v623
    %v948 = vpack.c.b16 %v632, %v628
    %v949 = vpack.c.b16 %v633, %v629
    %v950 = vpack.c.b16 %v634, %v630
    %v951 = vpack.c.b16 %v635, %v631
    %v952 = vpack.c.b16 %v640, %v636
    %v953 = vpack.c.b16 %v641, %v637
    %v954 = vpack.c.b16 %v642, %v638
    %v955 = vpack.c.b16 %v643, %v639
    %v956 = vpack.c.b16 %v648, %v644
    %v957 = vpack.c.b16 %v649, %v645
    %v958 = vpack.c.b16 %v650, %v646
    %v959 = vpack.c.b16 %v651, %v647
    %v960 = vpack.c.b16 %v656, %v652
    %v961 = vpack.c.b16 %v657, %v653
    %v962 = vpack.c.b16 %v658, %v654
    %v963 = vpack.c.b16 %v659, %v655
    %v964 = vpack.c.b16 %v664, %v660
    %v965 = vpack.c.b16 %v665, %v661
    %v966 = vpack.c.b16 %v666, %v662
    %v967 = vpack.c.b16 %v667, %v663
    %v968 = vpack.c.b16 %v672, %v668
    %v969 = vpack.c.b16 %v673, %v669
    %v970 = vpack.c.b16 %v674, %v670
    %v971 = vpack.c.b16 %v675, %v671
    %v972 = vpack.c.b16 %v680, %v676
    %v973 = vpack.c.b16 %v681, %v677
    %v974 = vpack.c.b16 %v682, %v678
    %v975 = vpack.c.b16 %v683, %v679
    %v976 = vpack.c.b16 %v688, %v684
    %v977 = vpack.c.b16 %v689, %v685
    %v978 = vpack.c.b16 %v690, %v686
    %v979 = vpack.c.b16 %v691, %v687
    %v980 = vpack.c.b16 %v696, %v692
    %v981 = vpack.c.b16 %v697, %v693
    %v982 = vpack.c.b16 %v698, %v694
    %v983 = vpack.c.b16 %v699, %v695
    %v984 = vpack.c.b16 %v704, %v700
    %v985 = vpack.c.b16 %v705, %v701
    %v986 = vpack.c.b16 %v706, %v702
    %v987 = vpack.c.b16 %v707, %v703
    %v988 = vpack.c.b16 %v712, %v708
    %v989 = vpack.c.b16 %v713, %v709
    %v990 = vpack.c.b16 %v714, %v710
    %v991 = vpack.c.b16 %v715, %v711
    %v992 = vpack.c.b16 %v720, %v716
    %v993 = vpack.c.b16 %v721, %v717
    %v994 = vpack.c.b16 %v722, %v718
    %v995 = vpack.c.b16 %v723, %v719
    %v996 = vpack.c.b16 %v728, %v724
    %v997 = vpack.c.b16 %v729, %v725
    %v998 = vpack.c.b16 %v730, %v726
    %v999 = vpack.c.b16 %v731, %v727
    %v1000 = vpack.c.b16 %v736, %v732
    %v1001 = vpack.c.b16 %v737, %v733
    %v1002 = vpack.c.b16 %v738, %v734
    %v1003 = vpack.c.b16 %v739, %v735
    %v1004 = vpack.c.b16 %v744, %v740
    %v1005 = vpack.c.b16 %v745, %v741
    %v1006 = vpack.c.b16 %v746, %v742
    %v1007 = vpack.c.b16 %v747, %v743
    %v1008 = vpack.c.b16 %v752, %v748
    %v1009 = vpack.c.b16 %v753, %v749
    %v1010 = vpack.c.b16 %v754, %v750
    %v1011 = vpack.c.b16 %v755, %v751
    %v1012 = vpack.c.b16 %v760, %v756
    %v1013 = vpack.c.b16 %v761, %v757
    %v1014 = vpack.c.b16 %v762, %v758
    %v1015 = vpack.c.b16 %v763, %v759
    %v1016 = vpack.c.b16 %v768, %v764
    %v1017 = vpack.c.b16 %v769, %v765
    %v1018 = vpack.c.b16 %v770, %v766
    %v1019 = vpack.c.b16 %v771, %v767
    %v1020 = vpack.c.b16 %v776, %v772
    %v1021 = vpack.c.b16 %v777, %v773
    %v1022 = vpack.c.b16 %v778, %v774
    %v1023 = vpack.c.b16 %v779, %v775
    %v1024 = vpack.c.b16 %v784, %v780
    %v1025 = vpack.c.b16 %v785, %v781
    %v1026 = vpack.c.b16 %v786, %v782
    %v1027 = vpack.c.b16 %v787, %v783
    %v1028 = vpack.c.b16 %v792, %v788
    %v1029 = vpack.c.b16 %v793, %v789
    %v1030 = vpack.c.b16 %v794, %v790
    %v1031 = vpack.c.b16 %v795, %v791
    %v1032 = vpack.c.b16 %v800, %v796
    %v1033 = vpack.c.b16 %v801, %v797
    %v1034 = vpack.c.b16 %v802, %v798
    %v1035 = vpack.c.b16 %v803, %v799
    %v1036 = vpack.c.b16 %v808, %v804
    %v1037 = vpack.c.b16 %v809, %v805
    %v1038 = vpack.c.b16 %v810, %v806
    %v1039 = vpack.c.b16 %v811, %v807
    %v1040 = vpack.c.b16 %v816, %v812
    %v1041 = vpack.c.b16 %v817, %v813
    %v1042 = vpack.c.b16 %v818, %v814
    %v1043 = vpack.c.b16 %v819, %v815
    %v1044 = vpack.c.b16 %v824, %v820
    %v1045 = vpack.c.b16 %v825, %v821
    %v1046 = vpack.c.b16 %v826, %v822
    %v1047 = vpack.c.b16 %v827, %v823
    %v1048 = vpack.c.b16 %v832, %v828
    %v1049 = vpack.c.b16 %v833, %v829
    %v1050 = vpack.c.b16 %v834, %v830
    %v1051 = vpack.c.b16 %v835, %v831
    %v1052 = vpack.c.b16 %v840, %v836
    %v1053 = vpack.c.b16 %v841, %v837
    %v1054 = vpack.c.b16 %v842, %v838
    %v1055 = vpack.c.b16 %v843, %v839
    %v1056 = vpack.c.b16 %v848, %v844
    %v1057 = vpack.c.b16 %v849, %v845
    %v1058 = vpack.c.b16 %v850, %v846
    %v1059 = vpack.c.b16 %v851, %v847
    %v1060 = vpack.c.b16 %v856, %v852
    %v1061 = vpack.c.b16 %v857, %v853
    %v1062 = vpack.c.b16 %v858, %v854
    %v1063 = vpack.c.b16 %v859, %v855
    %v1064 = vpack.c.b16 %v864, %v860
    %v1065 = vpack.c.b16 %v865, %v861
    %v1066 = vpack.c.b16 %v866, %v862
    %v1067 = vpack.c.b16 %v867, %v863
    %v1068 = vpack.c.b16 %v872, %v868
    %v1069 = vpack.c.b16 %v873, %v869
    %v1070 = vpack.c.b16 %v874, %v870
    %v1071 = vpack.c.b16 %v875, %v871
    %v1072 = vpack.c.b16 %v880, %v876
    %v1073 = vpack.c.b16 %v881, %v877
    %v1074 = vpack.c.b16 %v882, %v878
    %v1075 = vpack.c.b16 %v883, %v879
    %1268 = vmatprep.subr.bf16.mxu0 %v885
    %1269 = vmatpush1.bf16.msra.mxu0 %v884
    %1270 = vmatprep.subr.bf16.mxu0 %v889
    %1271 = vmatpush1.bf16.msra.mxu0 %v888
    %1272 = vmatprep.subr.bf16.mxu0 %v893
    %1273 = vmatpush1.bf16.msra.mxu0 %v892
    %1274 = vmatprep.subr.bf16.mxu0 %v897
    %1275 = vmatpush1.bf16.msra.mxu0 %v896
    %1276 = vmatprep.subr.bf16.mxu0 %v901
    %1277 = vmatpush1.bf16.msra.mxu0 %v900
    %1278 = vmatprep.subr.bf16.mxu0 %v905
    %1279 = vmatpush1.bf16.msra.mxu0 %v904
    %1280 = vmatprep.subr.bf16.mxu0 %v909
    %1281 = vmatpush1.bf16.msra.mxu0 %v908
    %1282 = vmatprep.subr.bf16.mxu0 %v913
    %1283 = vmatpush1.bf16.msra.mxu0 %v912
    %1284 = vmatprep.subr.bf16.mxu0 %v917
    %1285 = vmatpush1.bf16.msra.mxu0 %v916
    %1286 = vmatprep.subr.bf16.mxu0 %v921
    %1287 = vmatpush1.bf16.msra.mxu0 %v920
    %1288 = vmatprep.subr.bf16.mxu0 %v925
    %1289 = vmatpush1.bf16.msra.mxu0 %v924
    %1290 = vmatprep.subr.bf16.mxu0 %v929
    %1291 = vmatpush1.bf16.msra.mxu0 %v928
    %1292 = vmatprep.subr.bf16.mxu0 %v933
    %1293 = vmatpush1.bf16.msra.mxu0 %v932
    %1294 = vmatprep.subr.bf16.mxu0 %v937
    %1295 = vmatpush1.bf16.msra.mxu0 %v936
    %1296 = vmatprep.subr.bf16.mxu0 %v941
    %1297 = vmatpush1.bf16.msra.mxu0 %v940
    %1298 = vmatprep.subr.bf16.mxu0 %v945
    %1299 = vmatpush1.bf16.msra.mxu0 %v944
    %1300 = vmatprep.mubr.bf16.mxu0 %v297
    %1301 = vmatmul.mubr.bf16.gmra.mrb[0].mxu0 %v296
    %v1302 = vpop.f32.mrb[0].mxu0
    %v1303 = vadd.f32 0.0, %v1302
    %v1304 = vpop.f32.mrb[0].mxu0
    %v1305 = vadd.f32 0.0, %v1304
    %v1306 = vpop.f32.mrb[0].mxu0
    %v1307 = vadd.f32 0.0, %v1306
    %v1308 = vpop.f32.mrb[0].mxu0
    %v1309 = vadd.f32 0.0, %v1308
    %1310 = vdwg.mxu0
    %1311 = vmatprep.subr.bf16.mxu0 %v949
    %1312 = vmatpush1.bf16.msra.mxu0 %v948
    %1313 = vmatprep.subr.bf16.mxu0 %v953
    %1314 = vmatpush1.bf16.msra.mxu0 %v952
    %1315 = vmatprep.subr.bf16.mxu0 %v957
    %1316 = vmatpush1.bf16.msra.mxu0 %v956
    %1317 = vmatprep.subr.bf16.mxu0 %v961
    %1318 = vmatpush1.bf16.msra.mxu0 %v960
    %1319 = vmatprep.subr.bf16.mxu0 %v965
    %1320 = vmatpush1.bf16.msra.mxu0 %v964
    %1321 = vmatprep.subr.bf16.mxu0 %v969
    %1322 = vmatpush1.bf16.msra.mxu0 %v968
    %1323 = vmatprep.subr.bf16.mxu0 %v973
    %1324 = vmatpush1.bf16.msra.mxu0 %v972
    %1325 = vmatprep.subr.bf16.mxu0 %v977
    %1326 = vmatpush1.bf16.msra.mxu0 %v976
    %1327 = vmatprep.subr.bf16.mxu0 %v981
    %1328 = vmatpush1.bf16.msra.mxu0 %v980
    %1329 = vmatprep.subr.bf16.mxu0 %v985
    %1330 = vmatpush1.bf16.msra.mxu0 %v984
    %1331 = vmatprep.subr.bf16.mxu0 %v989
    %1332 = vmatpush1.bf16.msra.mxu0 %v988
    %1333 = vmatprep.subr.bf16.mxu0 %v993
    %1334 = vmatpush1.bf16.msra.mxu0 %v992
    %1335 = vmatprep.subr.bf16.mxu0 %v997
    %1336 = vmatpush1.bf16.msra.mxu0 %v996
    %1337 = vmatprep.subr.bf16.mxu0 %v1001
    %1338 = vmatpush1.bf16.msra.mxu0 %v1000
    %1339 = vmatprep.subr.bf16.mxu0 %v1005
    %1340 = vmatpush1.bf16.msra.mxu0 %v1004
    %1341 = vmatprep.subr.bf16.mxu0 %v1009
    %1342 = vmatpush1.bf16.msra.mxu0 %v1008
    %1343 = vmatprep.mubr.bf16.mxu0 %v299
    %1344 = vmatmul.mubr.bf16.gmra.mrb[0].mxu0 %v298
    %v1345 = vpop.f32.mrb[0].mxu0
    %v1346 = vadd.f32 %v1303, %v1345
    %v1347 = vpop.f32.mrb[0].mxu0
    %v1348 = vadd.f32 %v1305, %v1347
    %v1349 = vpop.f32.mrb[0].mxu0
    %v1350 = vadd.f32 %v1307, %v1349
    %v1351 = vpop.f32.mrb[0].mxu0
    %v1352 = vadd.f32 %v1309, %v1351
    %1353 = vdwg.mxu0
    %1354 = vmatprep.subr.bf16.mxu0 %v1013
    %1355 = vmatpush1.bf16.msra.mxu0 %v1012
    %1356 = vmatprep.subr.bf16.mxu0 %v1017
    %1357 = vmatpush1.bf16.msra.mxu0 %v1016
    %1358 = vmatprep.subr.bf16.mxu0 %v1021
    %1359 = vmatpush1.bf16.msra.mxu0 %v1020
    %1360 = vmatprep.subr.bf16.mxu0 %v1025
    %1361 = vmatpush1.bf16.msra.mxu0 %v1024
    %1362 = vmatprep.subr.bf16.mxu0 %v1029
    %1363 = vmatpush1.bf16.msra.mxu0 %v1028
    %1364 = vmatprep.subr.bf16.mxu0 %v1033
    %1365 = vmatpush1.bf16.msra.mxu0 %v1032
    %1366 = vmatprep.subr.bf16.mxu0 %v1037
    %1367 = vmatpush1.bf16.msra.mxu0 %v1036
    %1368 = vmatprep.subr.bf16.mxu0 %v1041
    %1369 = vmatpush1.bf16.msra.mxu0 %v1040
    %1370 = vmatprep.subr.bf16.mxu0 %v1045
    %1371 = vmatpush1.bf16.msra.mxu0 %v1044
    %1372 = vmatprep.subr.bf16.mxu0 %v1049
    %1373 = vmatpush1.bf16.msra.mxu0 %v1048
    %1374 = vmatprep.subr.bf16.mxu0 %v1053
    %1375 = vmatpush1.bf16.msra.mxu0 %v1052
    %1376 = vmatprep.subr.bf16.mxu0 %v1057
    %1377 = vmatpush1.bf16.msra.mxu0 %v1056
    %1378 = vmatprep.subr.bf16.mxu0 %v1061
    %1379 = vmatpush1.bf16.msra.mxu0 %v1060
    %1380 = vmatprep.subr.bf16.mxu0 %v1065
    %1381 = vmatpush1.bf16.msra.mxu0 %v1064
    %1382 = vmatprep.subr.bf16.mxu0 %v1069
    %1383 = vmatpush1.bf16.msra.mxu0 %v1068
    %1384 = vmatprep.subr.bf16.mxu0 %v1073
    %1385 = vmatpush1.bf16.msra.mxu0 %v1072
    %1386 = vmatprep.mubr.bf16.mxu0 %v301
    %1387 = vmatmul.mubr.bf16.gmra.mrb[0].mxu0 %v300
    %v1388 = vpop.f32.mrb[0].mxu0
    %v1389 = vadd.f32 %v1346, %v1388
    %v1390 = vpop.f32.mrb[0].mxu0
    %v1391 = vadd.f32 %v1348, %v1390
    %v1392 = vpop.f32.mrb[0].mxu0
    %v1393 = vadd.f32 %v1350, %v1392
    %v1394 = vpop.f32.mrb[0].mxu0
    %v1395 = vadd.f32 %v1352, %v1394
    %1396 = vdwg.mxu0
    %1397 = vmatprep.subr.bf16.mxu0 %v887
    %1398 = vmatpush1.bf16.msra.mxu0 %v886
    %1399 = vmatprep.subr.bf16.mxu0 %v891
    %1400 = vmatpush1.bf16.msra.mxu0 %v890
    %1401 = vmatprep.subr.bf16.mxu0 %v895
    %1402 = vmatpush1.bf16.msra.mxu0 %v894
    %1403 = vmatprep.subr.bf16.mxu0 %v899
    %1404 = vmatpush1.bf16.msra.mxu0 %v898
    %1405 = vmatprep.subr.bf16.mxu0 %v903
    %1406 = vmatpush1.bf16.msra.mxu0 %v902
    %1407 = vmatprep.subr.bf16.mxu0 %v907
    %1408 = vmatpush1.bf16.msra.mxu0 %v906
    %1409 = vmatprep.subr.bf16.mxu0 %v911
    %1410 = vmatpush1.bf16.msra.mxu0 %v910
    %1411 = vmatprep.subr.bf16.mxu0 %v915
    %1412 = vmatpush1.bf16.msra.mxu0 %v914
    %1413 = vmatprep.subr.bf16.mxu0 %v919
    %1414 = vmatpush1.bf16.msra.mxu0 %v918
    %1415 = vmatprep.subr.bf16.mxu0 %v923
    %1416 = vmatpush1.bf16.msra.mxu0 %v922
    %1417 = vmatprep.subr.bf16.mxu0 %v927
    %1418 = vmatpush1.bf16.msra.mxu0 %v926
    %1419 = vmatprep.subr.bf16.mxu0 %v931
    %1420 = vmatpush1.bf16.msra.mxu0 %v930
    %1421 = vmatprep.subr.bf16.mxu0 %v935
    %1422 = vmatpush1.bf16.msra.mxu0 %v934
    %1423 = vmatprep.subr.bf16.mxu0 %v939
    %1424 = vmatpush1.bf16.msra.mxu0 %v938
    %1425 = vmatprep.subr.bf16.mxu0 %v943
    %1426 = vmatpush1.bf16.msra.mxu0 %v942
    %1427 = vmatprep.subr.bf16.mxu0 %v947
    %1428 = vmatpush1.bf16.msra.mxu0 %v946
    %1429 = vmatprep.mubr.bf16.mxu0 %v297
    %1430 = vmatmul.mubr.bf16.gmra.mrb[0].mxu0 %v296
    %v1431 = vpop.f32.mrb[0].mxu0
    %v1432 = vadd.f32 0.0, %v1431
    %v1433 = vpop.f32.mrb[0].mxu0
    %v1434 = vadd.f32 0.0, %v1433
    %v1435 = vpop.f32.mrb[0].mxu0
    %v1436 = vadd.f32 0.0, %v1435
    %v1437 = vpop.f32.mrb[0].mxu0
    %v1438 = vadd.f32 0.0, %v1437
    %1439 = vdwg.mxu0
    %1440 = vmatprep.subr.bf16.mxu0 %v951
    %1441 = vmatpush1.bf16.msra.mxu0 %v950
    %1442 = vmatprep.subr.bf16.mxu0 %v955
    %1443 = vmatpush1.bf16.msra.mxu0 %v954
    %1444 = vmatprep.subr.bf16.mxu0 %v959
    %1445 = vmatpush1.bf16.msra.mxu0 %v958
    %1446 = vmatprep.subr.bf16.mxu0 %v963
    %1447 = vmatpush1.bf16.msra.mxu0 %v962
    %1448 = vmatprep.subr.bf16.mxu0 %v967
    %1449 = vmatpush1.bf16.msra.mxu0 %v966
    %1450 = vmatprep.subr.bf16.mxu0 %v971
    %1451 = vmatpush1.bf16.msra.mxu0 %v970
    %1452 = vmatprep.subr.bf16.mxu0 %v975
    %1453 = vmatpush1.bf16.msra.mxu0 %v974
    %1454 = vmatprep.subr.bf16.mxu0 %v979
    %1455 = vmatpush1.bf16.msra.mxu0 %v978
    %1456 = vmatprep.subr.bf16.mxu0 %v983
    %1457 = vmatpush1.bf16.msra.mxu0 %v982
    %1458 = vmatprep.subr.bf16.mxu0 %v987
    %1459 = vmatpush1.bf16.msra.mxu0 %v986
    %1460 = vmatprep.subr.bf16.mxu0 %v991
    %1461 = vmatpush1.bf16.msra.mxu0 %v990
    %1462 = vmatprep.subr.bf16.mxu0 %v995
    %1463 = vmatpush1.bf16.msra.mxu0 %v994
    %1464 = vmatprep.subr.bf16.mxu0 %v999
    %1465 = vmatpush1.bf16.msra.mxu0 %v998
    %1466 = vmatprep.subr.bf16.mxu0 %v1003
    %1467 = vmatpush1.bf16.msra.mxu0 %v1002
    %1468 = vmatprep.subr.bf16.mxu0 %v1007
    %1469 = vmatpush1.bf16.msra.mxu0 %v1006
    %1470 = vmatprep.subr.bf16.mxu0 %v1011
    %1471 = vmatpush1.bf16.msra.mxu0 %v1010
    %1472 = vmatprep.mubr.bf16.mxu0 %v299
    %1473 = vmatmul.mubr.bf16.gmra.mrb[0].mxu0 %v298
    %v1474 = vpop.f32.mrb[0].mxu0
    %v1475 = vadd.f32 %v1432, %v1474
    %v1476 = vpop.f32.mrb[0].mxu0
    %v1477 = vadd.f32 %v1434, %v1476
    %v1478 = vpop.f32.mrb[0].mxu0
    %v1479 = vadd.f32 %v1436, %v1478
    %v1480 = vpop.f32.mrb[0].mxu0
    %v1481 = vadd.f32 %v1438, %v1480
    %1482 = vdwg.mxu0
    %1483 = vmatprep.subr.bf16.mxu0 %v1015
    %1484 = vmatpush1.bf16.msra.mxu0 %v1014
    %1485 = vmatprep.subr.bf16.mxu0 %v1019
    %1486 = vmatpush1.bf16.msra.mxu0 %v1018
    %1487 = vmatprep.subr.bf16.mxu0 %v1023
    %1488 = vmatpush1.bf16.msra.mxu0 %v1022
    %1489 = vmatprep.subr.bf16.mxu0 %v1027
    %1490 = vmatpush1.bf16.msra.mxu0 %v1026
    %1491 = vmatprep.subr.bf16.mxu0 %v1031
    %1492 = vmatpush1.bf16.msra.mxu0 %v1030
    %1493 = vmatprep.subr.bf16.mxu0 %v1035
    %1494 = vmatpush1.bf16.msra.mxu0 %v1034
    %1495 = vmatprep.subr.bf16.mxu0 %v1039
    %1496 = vmatpush1.bf16.msra.mxu0 %v1038
    %1497 = vmatprep.subr.bf16.mxu0 %v1043
    %1498 = vmatpush1.bf16.msra.mxu0 %v1042
    %1499 = vmatprep.subr.bf16.mxu0 %v1047
    %1500 = vmatpush1.bf16.msra.mxu0 %v1046
    %1501 = vmatprep.subr.bf16.mxu0 %v1051
    %1502 = vmatpush1.bf16.msra.mxu0 %v1050
    %1503 = vmatprep.subr.bf16.mxu0 %v1055
    %1504 = vmatpush1.bf16.msra.mxu0 %v1054
    %1505 = vmatprep.subr.bf16.mxu0 %v1059
    %1506 = vmatpush1.bf16.msra.mxu0 %v1058
    %1507 = vmatprep.subr.bf16.mxu0 %v1063
    %1508 = vmatpush1.bf16.msra.mxu0 %v1062
    %1509 = vmatprep.subr.bf16.mxu0 %v1067
    %1510 = vmatpush1.bf16.msra.mxu0 %v1066
    %1511 = vmatprep.subr.bf16.mxu0 %v1071
    %1512 = vmatpush1.bf16.msra.mxu0 %v1070
    %1513 = vmatprep.subr.bf16.mxu0 %v1075
    %1514 = vmatpush1.bf16.msra.mxu0 %v1074
    %1515 = vmatprep.mubr.bf16.mxu0 %v301
    %1516 = vmatmul.mubr.bf16.gmra.mrb[0].mxu0 %v300
    %v1517 = vpop.f32.mrb[0].mxu0
    %v1518 = vadd.f32 %v1475, %v1517
    %v1519 = vpop.f32.mrb[0].mxu0
    %v1520 = vadd.f32 %v1477, %v1519
    %v1521 = vpop.f32.mrb[0].mxu0
    %v1522 = vadd.f32 %v1479, %v1521
    %v1523 = vpop.f32.mrb[0].mxu0
    %v1524 = vadd.f32 %v1481, %v1523
    %1525 = vdwg.mxu0
    %v1526 = vpack.c.bf16 %v1393, %v1389
    %v1527 = vpack.c.bf16 %v1395, %v1391
    %v1528 = vpack.c.bf16 %v1522, %v1518
    %v1529 = vpack.c.bf16 %v1524, %v1520
    %v1530 = vld [vmem:[#allocation7] sm:$0xff]
    %v1531 = vld [vmem:[#allocation7 + $0x8] sm:$0xff]
    %v1532 = vld [vmem:[#allocation7 + $0x10] sm:$0xff]
    %v1533 = vld [vmem:[#allocation7 + $0x18] sm:$0xff]
    %v1534 = vld [vmem:[#allocation7 + $0x20] sm:$0xff]
    %v1535 = vld [vmem:[#allocation7 + $0x28] sm:$0xff]
    %v1536 = vld [vmem:[#allocation7 + $0x30] sm:$0xff]
    %v1537 = vld [vmem:[#allocation7 + $0x38] sm:$0xff]
    %v1538 = vld [vmem:[#allocation7 + $0x40] sm:$0xff]
    %v1539 = vld [vmem:[#allocation7 + $0x48] sm:$0xff]
    %v1540 = vld [vmem:[#allocation7 + $0x50] sm:$0xff]
    %v1541 = vld [vmem:[#allocation7 + $0x58] sm:$0xff]
    %v1542 = vld [vmem:[#allocation7 + $0x60] sm:$0xff]
    %v1543 = vld [vmem:[#allocation7 + $0x68] sm:$0xff]
    %v1544 = vld [vmem:[#allocation7 + $0x70] sm:$0xff]
    %v1545 = vld [vmem:[#allocation7 + $0x78] sm:$0xff]
    %v1546 = vld [vmem:[#allocation7 + $0x80] sm:$0xff]
    %v1547 = vld [vmem:[#allocation7 + $0x88] sm:$0xff]
    %v1548 = vld [vmem:[#allocation7 + $0x90] sm:$0xff]
    %v1549 = vld [vmem:[#allocation7 + $0x98] sm:$0xff]
    %v1550 = vld [vmem:[#allocation7 + $0xa0] sm:$0xff]
    %v1551 = vld [vmem:[#allocation7 + $0xa8] sm:$0xff]
    %v1552 = vld [vmem:[#allocation7 + $0xb0] sm:$0xff]
    %v1553 = vld [vmem:[#allocation7 + $0xb8] sm:$0xff]
    %v1554 = vld [vmem:[#allocation7 + $0xc0] sm:$0xff]
    %v1555 = vld [vmem:[#allocation7 + $0xc8] sm:$0xff]
    %v1556 = vld [vmem:[#allocation7 + $0xd0] sm:$0xff]
    %v1557 = vld [vmem:[#allocation7 + $0xd8] sm:$0xff]
    %v1558 = vld [vmem:[#allocation7 + $0xe0] sm:$0xff]
    %v1559 = vld [vmem:[#allocation7 + $0xe8] sm:$0xff]
    %v1560 = vld [vmem:[#allocation7 + $0xf0] sm:$0xff]
    %v1561 = vld [vmem:[#allocation7 + $0xf8] sm:$0xff]
    %v1562 = vld [vmem:[#allocation7 + $0x100] sm:$0xff]
    %v1563 = vld [vmem:[#allocation7 + $0x108] sm:$0xff]
    %v1564 = vld [vmem:[#allocation7 + $0x110] sm:$0xff]
    %v1565 = vld [vmem:[#allocation7 + $0x118] sm:$0xff]
    %v1566 = vld [vmem:[#allocation7 + $0x120] sm:$0xff]
    %v1567 = vld [vmem:[#allocation7 + $0x128] sm:$0xff]
    %v1568 = vld [vmem:[#allocation7 + $0x130] sm:$0xff]
    %v1569 = vld [vmem:[#allocation7 + $0x138] sm:$0xff]
    %v1570 = vld [vmem:[#allocation7 + $0x140] sm:$0xff]
    %v1571 = vld [vmem:[#allocation7 + $0x148] sm:$0xff]
    %v1572 = vld [vmem:[#allocation7 + $0x150] sm:$0xff]
    %v1573 = vld [vmem:[#allocation7 + $0x158] sm:$0xff]
    %v1574 = vld [vmem:[#allocation7 + $0x160] sm:$0xff]
    %v1575 = vld [vmem:[#allocation7 + $0x168] sm:$0xff]
    %v1576 = vld [vmem:[#allocation7 + $0x170] sm:$0xff]
    %v1577 = vld [vmem:[#allocation7 + $0x178] sm:$0xff]
    %v1578 = vld [vmem:[#allocation7 + $0x180] sm:$0xff]
    %v1579 = vld [vmem:[#allocation7 + $0x188] sm:$0xff]
    %v1580 = vld [vmem:[#allocation7 + $0x190] sm:$0xff]
    %v1581 = vld [vmem:[#allocation7 + $0x198] sm:$0xff]
    %v1582 = vld [vmem:[#allocation7 + $0x1a0] sm:$0xff]
    %v1583 = vld [vmem:[#allocation7 + $0x1a8] sm:$0xff]
    %v1584 = vld [vmem:[#allocation7 + $0x1b0] sm:$0xff]
    %v1585 = vld [vmem:[#allocation7 + $0x1b8] sm:$0xff]
    %v1586 = vld [vmem:[#allocation7 + $0x1c0] sm:$0xff]
    %v1587 = vld [vmem:[#allocation7 + $0x1c8] sm:$0xff]
    %v1588 = vld [vmem:[#allocation7 + $0x1d0] sm:$0xff]
    %v1589 = vld [vmem:[#allocation7 + $0x1d8] sm:$0xff]
    %v1590 = vld [vmem:[#allocation7 + $0x1e0] sm:$0xff]
    %v1591 = vld [vmem:[#allocation7 + $0x1e8] sm:$0xff]
    %v1592 = vld [vmem:[#allocation7 + $0x1f0] sm:$0xff]
    %v1593 = vld [vmem:[#allocation7 + $0x1f8] sm:$0xff]
    %v1594 = vld [vmem:[%s3] sm:$0x3]
    %v1596 = vlaneseq
    %v1597 = vshrl.u32 %v1596, 7
    %v1598 = vsub.s32 0, %v1597
    %v1599 = vrot.slane %v1594, %v1598
    %v1600 = vlaneseq
    %v1601 = vshrl.u32 %v1600, 7
    %v1602 = vsub.s32 1, %v1601
    %v1603 = vrot.slane %v1594, %v1602
    %v1670 = vunpack.c.l.b16 %v1530
    %v1671 = vunpack.c.h.b16 %v1530
    %v1672 = vunpack.c.l.b16 %v1531
    %v1673 = vunpack.c.h.b16 %v1531
    %v1674 = vunpack.c.l.b16 %v1532
    %v1675 = vunpack.c.h.b16 %v1532
    %v1676 = vunpack.c.l.b16 %v1533
    %v1677 = vunpack.c.h.b16 %v1533
    %v1678 = vunpack.c.l.b16 %v1534
    %v1679 = vunpack.c.h.b16 %v1534
    %v1680 = vunpack.c.l.b16 %v1535
    %v1681 = vunpack.c.h.b16 %v1535
    %v1682 = vunpack.c.l.b16 %v1536
    %v1683 = vunpack.c.h.b16 %v1536
    %v1684 = vunpack.c.l.b16 %v1537
    %v1685 = vunpack.c.h.b16 %v1537
    %v1686 = vunpack.c.l.b16 %v1538
    %v1687 = vunpack.c.h.b16 %v1538
    %v1688 = vunpack.c.l.b16 %v1539
    %v1689 = vunpack.c.h.b16 %v1539
    %v1690 = vunpack.c.l.b16 %v1540
    %v1691 = vunpack.c.h.b16 %v1540
    %v1692 = vunpack.c.l.b16 %v1541
    %v1693 = vunpack.c.h.b16 %v1541
    %v1694 = vunpack.c.l.b16 %v1542
    %v1695 = vunpack.c.h.b16 %v1542
    %v1696 = vunpack.c.l.b16 %v1543
    %v1697 = vunpack.c.h.b16 %v1543
    %v1698 = vunpack.c.l.b16 %v1544
    %v1699 = vunpack.c.h.b16 %v1544
    %v1700 = vunpack.c.l.b16 %v1545
    %v1701 = vunpack.c.h.b16 %v1545
    %v1702 = vunpack.c.l.b16 %v1546
    %v1703 = vunpack.c.h.b16 %v1546
    %v1704 = vunpack.c.l.b16 %v1547
    %v1705 = vunpack.c.h.b16 %v1547
    %v1706 = vunpack.c.l.b16 %v1548
    %v1707 = vunpack.c.h.b16 %v1548
    %v1708 = vunpack.c.l.b16 %v1549
    %v1709 = vunpack.c.h.b16 %v1549
    %v1710 = vunpack.c.l.b16 %v1550
    %v1711 = vunpack.c.h.b16 %v1550
    %v1712 = vunpack.c.l.b16 %v1551
    %v1713 = vunpack.c.h.b16 %v1551
    %v1714 = vunpack.c.l.b16 %v1552
    %v1715 = vunpack.c.h.b16 %v1552
    %v1716 = vunpack.c.l.b16 %v1553
    %v1717 = vunpack.c.h.b16 %v1553
    %v1718 = vunpack.c.l.b16 %v1554
    %v1719 = vunpack.c.h.b16 %v1554
    %v1720 = vunpack.c.l.b16 %v1555
    %v1721 = vunpack.c.h.b16 %v1555
    %v1722 = vunpack.c.l.b16 %v1556
    %v1723 = vunpack.c.h.b16 %v1556
    %v1724 = vunpack.c.l.b16 %v1557
    %v1725 = vunpack.c.h.b16 %v1557
    %v1726 = vunpack.c.l.b16 %v1558
    %v1727 = vunpack.c.h.b16 %v1558
    %v1728 = vunpack.c.l.b16 %v1559
    %v1729 = vunpack.c.h.b16 %v1559
    %v1730 = vunpack.c.l.b16 %v1560
    %v1731 = vunpack.c.h.b16 %v1560
    %v1732 = vunpack.c.l.b16 %v1561
    %v1733 = vunpack.c.h.b16 %v1561
    %v1734 = vunpack.c.l.b16 %v1562
    %v1735 = vunpack.c.h.b16 %v1562
    %v1736 = vunpack.c.l.b16 %v1563
    %v1737 = vunpack.c.h.b16 %v1563
    %v1738 = vunpack.c.l.b16 %v1564
    %v1739 = vunpack.c.h.b16 %v1564
    %v1740 = vunpack.c.l.b16 %v1565
    %v1741 = vunpack.c.h.b16 %v1565
    %v1742 = vunpack.c.l.b16 %v1566
    %v1743 = vunpack.c.h.b16 %v1566
    %v1744 = vunpack.c.l.b16 %v1567
    %v1745 = vunpack.c.h.b16 %v1567
    %v1746 = vunpack.c.l.b16 %v1568
    %v1747 = vunpack.c.h.b16 %v1568
    %v1748 = vunpack.c.l.b16 %v1569
    %v1749 = vunpack.c.h.b16 %v1569
    %v1750 = vunpack.c.l.b16 %v1570
    %v1751 = vunpack.c.h.b16 %v1570
    %v1752 = vunpack.c.l.b16 %v1571
    %v1753 = vunpack.c.h.b16 %v1571
    %v1754 = vunpack.c.l.b16 %v1572
    %v1755 = vunpack.c.h.b16 %v1572
    %v1756 = vunpack.c.l.b16 %v1573
    %v1757 = vunpack.c.h.b16 %v1573
    %v1758 = vunpack.c.l.b16 %v1574
    %v1759 = vunpack.c.h.b16 %v1574
    %v1760 = vunpack.c.l.b16 %v1575
    %v1761 = vunpack.c.h.b16 %v1575
    %v1762 = vunpack.c.l.b16 %v1576
    %v1763 = vunpack.c.h.b16 %v1576
    %v1764 = vunpack.c.l.b16 %v1577
    %v1765 = vunpack.c.h.b16 %v1577
    %v1766 = vunpack.c.l.b16 %v1578
    %v1767 = vunpack.c.h.b16 %v1578
    %v1768 = vunpack.c.l.b16 %v1579
    %v1769 = vunpack.c.h.b16 %v1579
    %v1770 = vunpack.c.l.b16 %v1580
    %v1771 = vunpack.c.h.b16 %v1580
    %v1772 = vunpack.c.l.b16 %v1581
    %v1773 = vunpack.c.h.b16 %v1581
    %v1774 = vunpack.c.l.b16 %v1582
    %v1775 = vunpack.c.h.b16 %v1582
    %v1776 = vunpack.c.l.b16 %v1583
    %v1777 = vunpack.c.h.b16 %v1583
    %v1778 = vunpack.c.l.b16 %v1584
    %v1779 = vunpack.c.h.b16 %v1584
    %v1780 = vunpack.c.l.b16 %v1585
    %v1781 = vunpack.c.h.b16 %v1585
    %v1782 = vunpack.c.l.b16 %v1586
    %v1783 = vunpack.c.h.b16 %v1586
    %v1784 = vunpack.c.l.b16 %v1587
    %v1785 = vunpack.c.h.b16 %v1587
    %v1786 = vunpack.c.l.b16 %v1588
    %v1787 = vunpack.c.h.b16 %v1588
    %v1788 = vunpack.c.l.b16 %v1589
    %v1789 = vunpack.c.h.b16 %v1589
    %v1790 = vunpack.c.l.b16 %v1590
    %v1791 = vunpack.c.h.b16 %v1590
    %v1792 = vunpack.c.l.b16 %v1591
    %v1793 = vunpack.c.h.b16 %v1591
    %v1794 = vunpack.c.l.b16 %v1592
    %v1795 = vunpack.c.h.b16 %v1592
    %v1796 = vunpack.c.l.b16 %v1593
    %v1797 = vunpack.c.h.b16 %v1593
    %v1798 = vpack.c.b16 %v1672, %v1670
    %v1799 = vpack.c.b16 %v1673, %v1671
    %v1800 = vpack.c.b16 %v1676, %v1674
    %v1801 = vpack.c.b16 %v1677, %v1675
    %v1802 = vpack.c.b16 %v1680, %v1678
    %v1803 = vpack.c.b16 %v1681, %v1679
    %v1804 = vpack.c.b16 %v1684, %v1682
    %v1805 = vpack.c.b16 %v1685, %v1683
    %v1806 = vpack.c.b16 %v1688, %v1686
    %v1807 = vpack.c.b16 %v1689, %v1687
    %v1808 = vpack.c.b16 %v1692, %v1690
    %v1809 = vpack.c.b16 %v1693, %v1691
    %v1810 = vpack.c.b16 %v1696, %v1694
    %v1811 = vpack.c.b16 %v1697, %v1695
    %v1812 = vpack.c.b16 %v1700, %v1698
    %v1813 = vpack.c.b16 %v1701, %v1699
    %v1814 = vpack.c.b16 %v1704, %v1702
    %v1815 = vpack.c.b16 %v1705, %v1703
    %v1816 = vpack.c.b16 %v1708, %v1706
    %v1817 = vpack.c.b16 %v1709, %v1707
    %v1818 = vpack.c.b16 %v1712, %v1710
    %v1819 = vpack.c.b16 %v1713, %v1711
    %v1820 = vpack.c.b16 %v1716, %v1714
    %v1821 = vpack.c.b16 %v1717, %v1715
    %v1822 = vpack.c.b16 %v1720, %v1718
    %v1823 = vpack.c.b16 %v1721, %v1719
    %v1824 = vpack.c.b16 %v1724, %v1722
    %v1825 = vpack.c.b16 %v1725, %v1723
    %v1826 = vpack.c.b16 %v1728, %v1726
    %v1827 = vpack.c.b16 %v1729, %v1727
    %v1828 = vpack.c.b16 %v1732, %v1730
    %v1829 = vpack.c.b16 %v1733, %v1731
    %v1830 = vpack.c.b16 %v1736, %v1734
    %v1831 = vpack.c.b16 %v1737, %v1735
    %v1832 = vpack.c.b16 %v1740, %v1738
    %v1833 = vpack.c.b16 %v1741, %v1739
    %v1834 = vpack.c.b16 %v1744, %v1742
    %v1835 = vpack.c.b16 %v1745, %v1743
    %v1836 = vpack.c.b16 %v1748, %v1746
    %v1837 = vpack.c.b16 %v1749, %v1747
    %v1838 = vpack.c.b16 %v1752, %v1750
    %v1839 = vpack.c.b16 %v1753, %v1751
    %v1840 = vpack.c.b16 %v1756, %v1754
    %v1841 = vpack.c.b16 %v1757, %v1755
    %v1842 = vpack.c.b16 %v1760, %v1758
    %v1843 = vpack.c.b16 %v1761, %v1759
    %v1844 = vpack.c.b16 %v1764, %v1762
    %v1845 = vpack.c.b16 %v1765, %v1763
    %v1846 = vpack.c.b16 %v1768, %v1766
    %v1847 = vpack.c.b16 %v1769, %v1767
    %v1848 = vpack.c.b16 %v1772, %v1770
    %v1849 = vpack.c.b16 %v1773, %v1771
    %v1850 = vpack.c.b16 %v1776, %v1774
    %v1851 = vpack.c.b16 %v1777, %v1775
    %v1852 = vpack.c.b16 %v1780, %v1778
    %v1853 = vpack.c.b16 %v1781, %v1779
    %v1854 = vpack.c.b16 %v1784, %v1782
    %v1855 = vpack.c.b16 %v1785, %v1783
    %v1856 = vpack.c.b16 %v1788, %v1786
    %v1857 = vpack.c.b16 %v1789, %v1787
    %v1858 = vpack.c.b16 %v1792, %v1790
    %v1859 = vpack.c.b16 %v1793, %v1791
    %v1860 = vpack.c.b16 %v1796, %v1794
    %v1861 = vpack.c.b16 %v1797, %v1795
    %1926 = vmatprep.subr.bf16.mxu0 %v1799
    %1927 = vmatpush1.bf16.msra.mxu0 %v1798
    %1928 = vmatprep.subr.bf16.mxu0 %v1801
    %1929 = vmatpush1.bf16.msra.mxu0 %v1800
    %1930 = vmatprep.subr.bf16.mxu0 %v1803
    %1931 = vmatpush1.bf16.msra.mxu0 %v1802
    %1932 = vmatprep.subr.bf16.mxu0 %v1805
    %1933 = vmatpush1.bf16.msra.mxu0 %v1804
    %1934 = vmatprep.subr.bf16.mxu0 %v1807
    %1935 = vmatpush1.bf16.msra.mxu0 %v1806
    %1936 = vmatprep.subr.bf16.mxu0 %v1809
    %1937 = vmatpush1.bf16.msra.mxu0 %v1808
    %1938 = vmatprep.subr.bf16.mxu0 %v1811
    %1939 = vmatpush1.bf16.msra.mxu0 %v1810
    %1940 = vmatprep.subr.bf16.mxu0 %v1813
    %1941 = vmatpush1.bf16.msra.mxu0 %v1812
    %1942 = vmatprep.subr.bf16.mxu0 %v1815
    %1943 = vmatpush1.bf16.msra.mxu0 %v1814
    %1944 = vmatprep.subr.bf16.mxu0 %v1817
    %1945 = vmatpush1.bf16.msra.mxu0 %v1816
    %1946 = vmatprep.subr.bf16.mxu0 %v1819
    %1947 = vmatpush1.bf16.msra.mxu0 %v1818
    %1948 = vmatprep.subr.bf16.mxu0 %v1821
    %1949 = vmatpush1.bf16.msra.mxu0 %v1820
    %1950 = vmatprep.subr.bf16.mxu0 %v1823
    %1951 = vmatpush1.bf16.msra.mxu0 %v1822
    %1952 = vmatprep.subr.bf16.mxu0 %v1825
    %1953 = vmatpush1.bf16.msra.mxu0 %v1824
    %1954 = vmatprep.subr.bf16.mxu0 %v1827
    %1955 = vmatpush1.bf16.msra.mxu0 %v1826
    %1956 = vmatprep.subr.bf16.mxu0 %v1829
    %1957 = vmatpush1.bf16.msra.mxu0 %v1828
    %1958 = vmatprep.mubr.bf16.mxu0 %v1527
    %1959 = vmatmul.mubr.bf16.gmra.mrb[0].mxu0 %v1526
    %v1960 = vpop.f32.mrb[0].mxu0
    %v1961 = vadd.f32 %v1599, %v1960
    %v1962 = vpop.f32.mrb[0].mxu0
    %v1963 = vadd.f32 %v1603, %v1962
    %v1964 = vpop.f32.mrb[0].mxu0
    %v1965 = vadd.f32 %v1599, %v1964
    %v1966 = vpop.f32.mrb[0].mxu0
    %v1967 = vadd.f32 %v1603, %v1966
    %1968 = vdwg.mxu0
    %1969 = vmatprep.subr.bf16.mxu0 %v1831
    %1970 = vmatpush1.bf16.msra.mxu0 %v1830
    %1971 = vmatprep.subr.bf16.mxu0 %v1833
    %1972 = vmatpush1.bf16.msra.mxu0 %v1832
    %1973 = vmatprep.subr.bf16.mxu0 %v1835
    %1974 = vmatpush1.bf16.msra.mxu0 %v1834
    %1975 = vmatprep.subr.bf16.mxu0 %v1837
    %1976 = vmatpush1.bf16.msra.mxu0 %v1836
    %1977 = vmatprep.subr.bf16.mxu0 %v1839
    %1978 = vmatpush1.bf16.msra.mxu0 %v1838
    %1979 = vmatprep.subr.bf16.mxu0 %v1841
    %1980 = vmatpush1.bf16.msra.mxu0 %v1840
    %1981 = vmatprep.subr.bf16.mxu0 %v1843
    %1982 = vmatpush1.bf16.msra.mxu0 %v1842
    %1983 = vmatprep.subr.bf16.mxu0 %v1845
    %1984 = vmatpush1.bf16.msra.mxu0 %v1844
    %1985 = vmatprep.subr.bf16.mxu0 %v1847
    %1986 = vmatpush1.bf16.msra.mxu0 %v1846
    %1987 = vmatprep.subr.bf16.mxu0 %v1849
    %1988 = vmatpush1.bf16.msra.mxu0 %v1848
    %1989 = vmatprep.subr.bf16.mxu0 %v1851
    %1990 = vmatpush1.bf16.msra.mxu0 %v1850
    %1991 = vmatprep.subr.bf16.mxu0 %v1853
    %1992 = vmatpush1.bf16.msra.mxu0 %v1852
    %1993 = vmatprep.subr.bf16.mxu0 %v1855
    %1994 = vmatpush1.bf16.msra.mxu0 %v1854
    %1995 = vmatprep.subr.bf16.mxu0 %v1857
    %1996 = vmatpush1.bf16.msra.mxu0 %v1856
    %1997 = vmatprep.subr.bf16.mxu0 %v1859
    %1998 = vmatpush1.bf16.msra.mxu0 %v1858
    %1999 = vmatprep.subr.bf16.mxu0 %v1861
    %2000 = vmatpush1.bf16.msra.mxu0 %v1860
    %2001 = vmatprep.mubr.bf16.mxu0 %v1529
    %2002 = vmatmul.mubr.bf16.gmra.mrb[0].mxu0 %v1528
    %v2003 = vpop.f32.mrb[0].mxu0
    %v2004 = vadd.f32 %v1961, %v2003
    %v2005 = vpop.f32.mrb[0].mxu0
    %v2006 = vadd.f32 %v1963, %v2005
    %v2007 = vpop.f32.mrb[0].mxu0
    %v2008 = vadd.f32 %v1965, %v2007
    %v2009 = vpop.f32.mrb[0].mxu0
    %v2010 = vadd.f32 %v1967, %v2009
    %2011 = vdwg.mxu0
    %v2012 = vmax.f32 %v2004, 0.0
    %v2013 = vmax.f32 %v2006, 0.0
    %v2014 = vmax.f32 %v2008, 0.0
    %v2015 = vmax.f32 %v2010, 0.0
    %v2016 = vpack.c.bf16 %v2014, %v2012
    %v2017 = vpack.c.bf16 %v2015, %v2013
    %v2018 = vld [vmem:[#allocation8] sm:$0xf]
    %v2019 = vld [vmem:[#allocation8 + $0x4] sm:$0xf]
    %v2020 = vld [vmem:[#allocation8 + $0x8] sm:$0xf]
    %v2021 = vld [vmem:[#allocation8 + $0xc] sm:$0xf]
    %v2022 = vld [vmem:[#allocation8 + $0x10] sm:$0xf]
    %v2023 = vld [vmem:[#allocation8 + $0x14] sm:$0xf]
    %v2024 = vld [vmem:[#allocation8 + $0x18] sm:$0xf]
    %v2025 = vld [vmem:[#allocation8 + $0x1c] sm:$0xf]
    %v2026 = vld [vmem:[#allocation8 + $0x20] sm:$0xf]
    %v2027 = vld [vmem:[#allocation8 + $0x24] sm:$0xf]
    %v2028 = vld [vmem:[#allocation8 + $0x28] sm:$0xf]
    %v2029 = vld [vmem:[#allocation8 + $0x2c] sm:$0xf]
    %v2030 = vld [vmem:[#allocation8 + $0x30] sm:$0xf]
    %v2031 = vld [vmem:[#allocation8 + $0x34] sm:$0xf]
    %v2032 = vld [vmem:[#allocation8 + $0x38] sm:$0xf]
    %v2033 = vld [vmem:[#allocation8 + $0x3c] sm:$0xf]
    %v2034 = vld [vmem:[#allocation8 + $0x40] sm:$0xf]
    %v2035 = vld [vmem:[#allocation8 + $0x44] sm:$0xf]
    %v2036 = vld [vmem:[#allocation8 + $0x48] sm:$0xf]
    %v2037 = vld [vmem:[#allocation8 + $0x4c] sm:$0xf]
    %v2038 = vld [vmem:[#allocation8 + $0x50] sm:$0xf]
    %v2039 = vld [vmem:[#allocation8 + $0x54] sm:$0xf]
    %v2040 = vld [vmem:[#allocation8 + $0x58] sm:$0xf]
    %v2041 = vld [vmem:[#allocation8 + $0x5c] sm:$0xf]
    %v2042 = vld [vmem:[#allocation8 + $0x60] sm:$0xf]
    %v2043 = vld [vmem:[#allocation8 + $0x64] sm:$0xf]
    %v2044 = vld [vmem:[#allocation8 + $0x68] sm:$0xf]
    %v2045 = vld [vmem:[#allocation8 + $0x6c] sm:$0xf]
    %v2046 = vld [vmem:[#allocation8 + $0x70] sm:$0xf]
    %v2047 = vld [vmem:[#allocation8 + $0x74] sm:$0xf]
    %v2048 = vld [vmem:[#allocation8 + $0x78] sm:$0xf]
    %v2049 = vld [vmem:[#allocation8 + $0x7c] sm:$0xf]
    %v2050 = vld [vmem:[%s5] sm:$0x1]
    %v2052 = vlaneseq
    %v2053 = vshrl.u32 %v2052, 7
    %v2054 = vsub.s32 0, %v2053
    %v2055 = vrot.slane %v2050, %v2054
    %v2089 = vunpack.c.l.b16 %v2018
    %v2090 = vunpack.c.l.b16 %v2019
    %v2091 = vunpack.c.l.b16 %v2020
    %v2092 = vunpack.c.l.b16 %v2021
    %v2093 = vunpack.c.l.b16 %v2022
    %v2094 = vunpack.c.l.b16 %v2023
    %v2095 = vunpack.c.l.b16 %v2024
    %v2096 = vunpack.c.l.b16 %v2025
    %v2097 = vunpack.c.l.b16 %v2026
    %v2098 = vunpack.c.l.b16 %v2027
    %v2099 = vunpack.c.l.b16 %v2028
    %v2100 = vunpack.c.l.b16 %v2029
    %v2101 = vunpack.c.l.b16 %v2030
    %v2102 = vunpack.c.l.b16 %v2031
    %v2103 = vunpack.c.l.b16 %v2032
    %v2104 = vunpack.c.l.b16 %v2033
    %v2105 = vunpack.c.l.b16 %v2034
    %v2106 = vunpack.c.l.b16 %v2035
    %v2107 = vunpack.c.l.b16 %v2036
    %v2108 = vunpack.c.l.b16 %v2037
    %v2109 = vunpack.c.l.b16 %v2038
    %v2110 = vunpack.c.l.b16 %v2039
    %v2111 = vunpack.c.l.b16 %v2040
    %v2112 = vunpack.c.l.b16 %v2041
    %v2113 = vunpack.c.l.b16 %v2042
    %v2114 = vunpack.c.l.b16 %v2043
    %v2115 = vunpack.c.l.b16 %v2044
    %v2116 = vunpack.c.l.b16 %v2045
    %v2117 = vunpack.c.l.b16 %v2046
    %v2118 = vunpack.c.l.b16 %v2047
    %v2119 = vunpack.c.l.b16 %v2048
    %v2120 = vunpack.c.l.b16 %v2049
    %v2121 = vpack.c.b16 %v2090, %v2089
    %v2122 = vpack.c.b16 %v2092, %v2091
    %v2123 = vpack.c.b16 %v2094, %v2093
    %v2124 = vpack.c.b16 %v2096, %v2095
    %v2125 = vpack.c.b16 %v2098, %v2097
    %v2126 = vpack.c.b16 %v2100, %v2099
    %v2127 = vpack.c.b16 %v2102, %v2101
    %v2128 = vpack.c.b16 %v2104, %v2103
    %v2129 = vpack.c.b16 %v2106, %v2105
    %v2130 = vpack.c.b16 %v2108, %v2107
    %v2131 = vpack.c.b16 %v2110, %v2109
    %v2132 = vpack.c.b16 %v2112, %v2111
    %v2133 = vpack.c.b16 %v2114, %v2113
    %v2134 = vpack.c.b16 %v2116, %v2115
    %v2135 = vpack.c.b16 %v2118, %v2117
    %v2136 = vpack.c.b16 %v2120, %v2119
    %2153 = vmatprep.subr.bf16.mxu0 0
    %2154 = vmatpush1.bf16.msra.mxu0 %v2121
    %2155 = vmatprep.subr.bf16.mxu0 0
    %2156 = vmatpush1.bf16.msra.mxu0 %v2122
    %2157 = vmatprep.subr.bf16.mxu0 0
    %2158 = vmatpush1.bf16.msra.mxu0 %v2123
    %2159 = vmatprep.subr.bf16.mxu0 0
    %2160 = vmatpush1.bf16.msra.mxu0 %v2124
    %2161 = vmatprep.subr.bf16.mxu0 0
    %2162 = vmatpush1.bf16.msra.mxu0 %v2125
    %2163 = vmatprep.subr.bf16.mxu0 0
    %2164 = vmatpush1.bf16.msra.mxu0 %v2126
    %2165 = vmatprep.subr.bf16.mxu0 0
    %2166 = vmatpush1.bf16.msra.mxu0 %v2127
    %2167 = vmatprep.subr.bf16.mxu0 0
    %2168 = vmatpush1.bf16.msra.mxu0 %v2128
    %2169 = vmatprep.subr.bf16.mxu0 0
    %2170 = vmatpush1.bf16.msra.mxu0 %v2129
    %2171 = vmatprep.subr.bf16.mxu0 0
    %2172 = vmatpush1.bf16.msra.mxu0 %v2130
    %2173 = vmatprep.subr.bf16.mxu0 0
    %2174 = vmatpush1.bf16.msra.mxu0 %v2131
    %2175 = vmatprep.subr.bf16.mxu0 0
    %2176 = vmatpush1.bf16.msra.mxu0 %v2132
    %2177 = vmatprep.subr.bf16.mxu0 0
    %2178 = vmatpush1.bf16.msra.mxu0 %v2133
    %2179 = vmatprep.subr.bf16.mxu0 0
    %2180 = vmatpush1.bf16.msra.mxu0 %v2134
    %2181 = vmatprep.subr.bf16.mxu0 0
    %2182 = vmatpush1.bf16.msra.mxu0 %v2135
    %2183 = vmatprep.subr.bf16.mxu0 0
    %2184 = vmatpush1.bf16.msra.mxu0 %v2136
    %2185 = vmatprep.mubr.bf16.mxu0 %v2017
    %2186 = vmatmul.mubr.bf16.gmra.mrb[0].mxu0 %v2016
    %v2187 = vpop.f32.mrb[0].mxu0
    %v2188 = vadd.f32 %v2055, %v2187
    %v2189 = vpop.f32.mrb[0].mxu0
    %v2190 = vpop.f32.mrb[0].mxu0
    %v2191 = vadd.f32 %v2055, %v2190
    %v2192 = vpop.f32.mrb[0].mxu0
    %2193 = vdwg.mxu0
    %2194 = vst [vmem:[#allocation10] sm:$0xff] %v2188
    %2195 = vst [vmem:[#allocation10 + $0x8] sm:$0xff] %v2191
    // Predicated region
    $region42: #{tpu_custom_call.1} parent=1 // pred_check
      _
    $region43: #{tpu_custom_call.1} parent=1 // pred_check_branch
      %2197 = sbr.rel (0) target = $region45
    $region44: #{tpu_custom_call.1} parent=1 // pred_region
      %s2199 = ssub.s32 256, 256
      %2200 = vsyncadd [#allocation4], %s2199
      %s2201 = sshll.u32 [#allocation10], 4
      %s2202 = int_to_ptr.vmem [resolvable:$true] %s2201
      %2207 = dma.vmem_to_hbm [thread:$0]  %s2202, 256, %s6, [#allocation4], 128, 128, 8
    $region45: #{tpu_custom_call.1} parent=1 // pred_fallthru
      _
    // Predicated region
    $region46: #{tpu_custom_call.1} parent=1 // pred_check
      _
    $region47: #{tpu_custom_call.1} parent=1 // pred_check_branch
      %2209 = sbr.rel (0) target = $region49
    $region48: #{tpu_custom_call.1} parent=1 // pred_region
      %2210 = dma.done [#allocation4], 256
    $region49: #{tpu_custom_call.1} parent=1 // pred_fallthru
      _
    %2211 = vsyncpa [#allocation3], 1
    %2212 = vsyncpa [#allocation6], 1
    %2213 = vsyncpa [#allocation9], 1
    %2214 = vsyncpa [#allocation4], 1

</llo_original>
